<compile_context>
chip_gen: v7x
topology: tpu7x:2x2x1
jax: 0.10.0
libtpu: 0.0.40
codegen_flags: <defaults>
</compile_context>

<pallas_src>
import math

import jax
import jax.numpy as jnp
from jax.experimental import pallas as pl
from jax.experimental.pallas import tpu as pltpu

HIDDEN = 256
LANE = 128


# ----------------------------------------------------------------------------
# Fused ICM forward kernel (one grid step = one batch tile; weights resident)
# ----------------------------------------------------------------------------
def _icm_kernel(state_ref, next_state_ref, action_ref,
                fe_w1_ref, fe_b1_ref, fe_w2_ref, fe_b2_ref,
                sf_w1_ref,                                  # fused (F, 2*HIDDEN)
                inv_w1n_ref, inv_b1_ref, inv_w2p_ref, inv_b2p_ref,
                fwd_w1a_ref, fwd_b1_ref, fwd_w2_ref, fwd_b2_ref,
                pred_action_ref, pred_next_ref, next_feat_ref):
    bf16 = jnp.bfloat16
    f32 = jnp.float32

    # ---- shared feature encoder (bf16 MXU, f32 accumulation / bias / ReLU) ----
    def encode(x):
        h = jnp.dot(x.astype(bf16), fe_w1_ref[...], preferred_element_type=f32)
        h = jnp.maximum(h + fe_b1_ref[...], 0.0)
        f = jnp.dot(h.astype(bf16), fe_w2_ref[...], preferred_element_type=f32)
        return f + fe_b2_ref[...]

    sf = encode(state_ref[...])          # feature_encoder(state)
    nsf = encode(next_state_ref[...])    # feature_encoder(next_state)
    next_feat_ref[...] = nsf.astype(next_feat_ref.dtype)

    # TODO(synk): the PyTorch NaN-detection prints are debug-only side effects
    # and are omitted (pl.debug_print only fires under interpret / log flags).

    # ---- fused sf-facing first layers: one wide (F, 512) MXU pass ----
    h_sf = jnp.dot(sf.astype(bf16), sf_w1_ref[...], preferred_element_type=f32)

    # ---- inverse model: concat replaced by split-weight accumulation ----
    hi = h_sf[:, :HIDDEN] + jnp.dot(nsf.astype(bf16), inv_w1n_ref[...],
                                    preferred_element_type=f32)
    hi = jnp.maximum(hi + inv_b1_ref[...], 0.0)
    pa = jnp.dot(hi.astype(bf16), inv_w2p_ref[...],
                 preferred_element_type=f32) + inv_b2p_ref[...]
    pred_action_ref[...] = pa.astype(pred_action_ref.dtype)   # lane-dense (TB, 128)

    # ---- forward model: concat replaced by split-weight accumulation ----
    hf = h_sf[:, HIDDEN:] + jnp.dot(action_ref[...].astype(bf16), fwd_w1a_ref[...],
                                    preferred_element_type=f32)
    hf = jnp.maximum(hf + fwd_b1_ref[...], 0.0)
    pnsf = jnp.dot(hf.astype(bf16), fwd_w2_ref[...],
                   preferred_element_type=f32) + fwd_b2_ref[...]
    pred_next_ref[...] = pnsf.astype(pred_next_ref.dtype)


def icm_forward(kparams, state, next_state, action, *, row_tile=512):
    """Fused ICM forward: returns (pred_action, pred_next_state_feat, next_state_feat)."""
    B, S = state.shape
    A = action.shape[1]
    F = kparams["fe_w2"].shape[1]
    Np = kparams["inv_w2p"].shape[1]
    dtype = state.dtype

    # pad batch to a multiple of 8 (f32 sublane) so row tiling stays layout-clean
    Bp = ((B + 7) // 8) * 8
    if Bp != B:
        pad = ((0, Bp - B), (0, 0))
        state = jnp.pad(state, pad)
        next_state = jnp.pad(next_state, pad)
        action = jnp.pad(action, pad)
    TB = min(row_tile, Bp)
    grid = (pl.cdiv(Bp, TB),)

    def row_spec(n):
        return pl.BlockSpec((TB, n), lambda i: (i, 0))

    def w_spec(arr):
        # whole array, constant block index -> stays VMEM-resident across steps
        return pl.BlockSpec(arr.shape, lambda i: (0, 0))

    weights = (
        kparams["fe_w1"], kparams["fe_b1"], kparams["fe_w2"], kparams["fe_b2"],
        kparams["sf_w1"],
        kparams["inv_w1_nsf"], kparams["inv_b1"], kparams["inv_w2p"], kparams["inv_b2p"],
        kparams["fwd_w1_act"], kparams["fwd_b1"], kparams["fwd_w2"], kparams["fwd_b2"],
    )

    pa_pad, pnsf, nsf = pl.pallas_call(
        _icm_kernel,
        out_shape=(
            jax.ShapeDtypeStruct((Bp, Np), dtype),   # pred_action (padded, lane-dense)
            jax.ShapeDtypeStruct((Bp, F), dtype),    # pred_next_state_feat
            jax.ShapeDtypeStruct((Bp, F), dtype),    # next_state_feat
        ),
        grid=grid,
        in_specs=[row_spec(S), row_spec(S), row_spec(A)] + [w_spec(w) for w in weights],
        out_specs=(row_spec(Np), row_spec(F), row_spec(F)),
        compiler_params=pltpu.CompilerParams(
            dimension_semantics=("parallel",)),
    )(state, next_state, action, *weights)

    pred_action = pa_pad[:B, :A]
    if Bp != B:
        pnsf = pnsf[:B]
        nsf = nsf[:B]
    return pred_action, pnsf, nsf


# ----------------------------------------------------------------------------
# Parameter construction (deterministic, PyTorch-Linear-style uniform init)
# ----------------------------------------------------------------------------
def _linear_params(key, in_dim, out_dim, dtype=jnp.float32):
    kw, kb = jax.random.split(key)
    bound = 1.0 / math.sqrt(in_dim)
    w = jax.random.uniform(kw, (in_dim, out_dim), dtype, -bound, bound)
    b = jax.random.uniform(kb, (1, out_dim), dtype, -bound, bound)
    return w, b


def init_icm_params(key, state_dim, action_dim, feature_dim=128, hidden=HIDDEN):
    keys = jax.random.split(key, 6)
    p = {}
    p["fe_w1"], p["fe_b1"] = _linear_params(keys[0], state_dim, hidden)
    p["fe_w2"], p["fe_b2"] = _linear_params(keys[1], hidden, feature_dim)
    p["inv_w1"], p["inv_b1"] = _linear_params(keys[2], feature_dim * 2, hidden)
    p["inv_w2"], p["inv_b2"] = _linear_params(keys[3], hidden, action_dim)
    p["fwd_w1"], p["fwd_b1"] = _linear_params(keys[4], feature_dim + action_dim, hidden)
    p["fwd_w2"], p["fwd_b2"] = _linear_params(keys[5], hidden, feature_dim)
    return p


def prepare_kernel_params(params, feature_dim, action_dim, weight_dtype=jnp.bfloat16):
    """One-time re-layout for the fused kernel:
       * split the concat-facing first-layer weights into contiguous halves,
       * fuse the two sf-facing halves into one wide (F, 2*HIDDEN) RHS,
       * zero-pad the tiny inverse-model output layer to a lane-dense width,
       * cast all matmul weights to bf16 (biases stay f32; dots accumulate in f32)."""
    hidden = params["inv_w2"].shape[0]
    n_pad = LANE * (-(-action_dim // LANE))          # round up to multiple of 128
    inv_w2p = jnp.zeros((hidden, n_pad), params["inv_w2"].dtype).at[:, :action_dim].set(
        params["inv_w2"])
    inv_b2p = jnp.zeros((1, n_pad), params["inv_b2"].dtype).at[:, :action_dim].set(
        params["inv_b2"])
    # fused sf-facing first-layer weights: [inverse-half | forward-half] on the out axis
    sf_w1 = jnp.concatenate(
        [params["inv_w1"][:feature_dim], params["fwd_w1"][:feature_dim]], axis=1)
    wd = weight_dtype
    return {
        "fe_w1": params["fe_w1"].astype(wd), "fe_b1": params["fe_b1"],
        "fe_w2": params["fe_w2"].astype(wd), "fe_b2": params["fe_b2"],
        "sf_w1": sf_w1.astype(wd),
        "inv_w1_nsf": params["inv_w1"][feature_dim:].astype(wd),
        "inv_b1": params["inv_b1"],
        "inv_w2p": inv_w2p.astype(wd), "inv_b2p": inv_b2p,
        "fwd_w1_act": params["fwd_w1"][feature_dim:].astype(wd),
        "fwd_b1": params["fwd_b1"],
        "fwd_w2": params["fwd_w2"].astype(wd), "fwd_b2": params["fwd_b2"],
    }


# ----------------------------------------------------------------------------
# Pure-JAX reference (mirrors the PyTorch module exactly, full f32)
# ----------------------------------------------------------------------------
def icm_forward_ref(params, state, next_state, action):
    def mlp(x, w1, b1, w2, b2):
        return jnp.maximum(x @ w1 + b1, 0.0) @ w2 + b2

    sf = mlp(state, params["fe_w1"], params["fe_b1"], params["fe_w2"], params["fe_b2"])
    nsf = mlp(next_state, params["fe_w1"], params["fe_b1"], params["fe_w2"], params["fe_b2"])
    pa = mlp(jnp.concatenate([sf, nsf], axis=1),
             params["inv_w1"], params["inv_b1"], params["inv_w2"], params["inv_b2"])
    pnsf = mlp(jnp.concatenate([sf, action], axis=1),
               params["fwd_w1"], params["fwd_b1"], params["fwd_w2"], params["fwd_b2"])
    return pa, pnsf, nsf


# ----------------------------------------------------------------------------
if __name__ == "__main__":
    B = 8              # batch
    STATE_DIM = 16
    ACTION_DIM = 4
    FEATURE_DIM = 128

    key = jax.random.PRNGKey(0)
    kp, ks, kn, ka = jax.random.split(key, 4)

    params = init_icm_params(kp, STATE_DIM, ACTION_DIM, FEATURE_DIM)
    kparams = prepare_kernel_params(params, FEATURE_DIM, ACTION_DIM)

    state = jax.random.normal(ks, (B, STATE_DIM), jnp.float32)
    next_state = jax.random.normal(kn, (B, STATE_DIM), jnp.float32)
    action = jax.random.normal(ka, (B, ACTION_DIM), jnp.float32)

    fwd = jax.jit(icm_forward)
    pred_action, pred_next_state_feat, next_state_feat = jax.block_until_ready(
        fwd(kparams, state, next_state, action)
    )

    # sanity check against the pure-JAX f32 reference (bf16 weights -> looser tol)
    ref = icm_forward_ref(params, state, next_state, action)
    assert pred_action.shape == (B, ACTION_DIM)
    assert pred_next_state_feat.shape == (B, FEATURE_DIM)
    assert next_state_feat.shape == (B, FEATURE_DIM)
    for got, want in zip((pred_action, pred_next_state_feat, next_state_feat), ref):
        assert jnp.allclose(got, want, atol=3e-2, rtol=3e-2), "mismatch vs reference"

    print("KERNEL_OK")
</pallas_src>

<mosaic_0001>
module attributes {stable_mosaic.version = 11 : i64} {
  func.func @_icm_kernel(%arg0: i32, %arg1: memref<8x16xf32, #tpu.memory_space<vmem>>, %arg2: memref<8x16xf32, #tpu.memory_space<vmem>>, %arg3: memref<8x4xf32, #tpu.memory_space<vmem>>, %arg4: memref<16x256xbf16, #tpu.memory_space<vmem>>, %arg5: memref<1x256xf32, #tpu.memory_space<vmem>>, %arg6: memref<256x128xbf16, #tpu.memory_space<vmem>>, %arg7: memref<1x128xf32, #tpu.memory_space<vmem>>, %arg8: memref<128x512xbf16, #tpu.memory_space<vmem>>, %arg9: memref<128x256xbf16, #tpu.memory_space<vmem>>, %arg10: memref<1x256xf32, #tpu.memory_space<vmem>>, %arg11: memref<256x128xbf16, #tpu.memory_space<vmem>>, %arg12: memref<1x128xf32, #tpu.memory_space<vmem>>, %arg13: memref<4x256xbf16, #tpu.memory_space<vmem>>, %arg14: memref<1x256xf32, #tpu.memory_space<vmem>>, %arg15: memref<256x128xbf16, #tpu.memory_space<vmem>>, %arg16: memref<1x128xf32, #tpu.memory_space<vmem>>, %arg17: memref<8x128xf32, #tpu.memory_space<vmem>>, %arg18: memref<8x128xf32, #tpu.memory_space<vmem>>, %arg19: memref<8x128xf32, #tpu.memory_space<vmem>>) attributes {dimension_semantics = [#tpu.dimension_semantics<parallel>], iteration_bounds = array<i64: 1>, scalar_prefetch = 0 : i64, scratch_operands = 0 : i64, tpu.core_type = #tpu.core_type<tc>, window_params = [{transform_indices = @transform_0, window_bounds = array<i64: 8, 16>}, {transform_indices = @transform_1, window_bounds = array<i64: 8, 16>}, {transform_indices = @transform_2, window_bounds = array<i64: 8, 4>}, {pipeline_mode = #tpu.pipeline_mode<synchronous>, transform_indices = @transform_3, window_bounds = array<i64: 16, 256>}, {pipeline_mode = #tpu.pipeline_mode<synchronous>, transform_indices = @transform_4, window_bounds = array<i64: 1, 256>}, {pipeline_mode = #tpu.pipeline_mode<synchronous>, transform_indices = @transform_5, window_bounds = array<i64: 256, 128>}, {pipeline_mode = #tpu.pipeline_mode<synchronous>, transform_indices = @transform_6, window_bounds = array<i64: 1, 128>}, {pipeline_mode = #tpu.pipeline_mode<synchronous>, transform_indices = @transform_7, window_bounds = array<i64: 128, 512>}, {pipeline_mode = #tpu.pipeline_mode<synchronous>, transform_indices = @transform_8, window_bounds = array<i64: 128, 256>}, {pipeline_mode = #tpu.pipeline_mode<synchronous>, transform_indices = @transform_9, window_bounds = array<i64: 1, 256>}, {pipeline_mode = #tpu.pipeline_mode<synchronous>, transform_indices = @transform_10, window_bounds = array<i64: 256, 128>}, {pipeline_mode = #tpu.pipeline_mode<synchronous>, transform_indices = @transform_11, window_bounds = array<i64: 1, 128>}, {pipeline_mode = #tpu.pipeline_mode<synchronous>, transform_indices = @transform_12, window_bounds = array<i64: 4, 256>}, {pipeline_mode = #tpu.pipeline_mode<synchronous>, transform_indices = @transform_13, window_bounds = array<i64: 1, 256>}, {pipeline_mode = #tpu.pipeline_mode<synchronous>, transform_indices = @transform_14, window_bounds = array<i64: 256, 128>}, {pipeline_mode = #tpu.pipeline_mode<synchronous>, transform_indices = @transform_15, window_bounds = array<i64: 1, 128>}, {transform_indices = @transform_16, window_bounds = array<i64: 8, 128>}, {transform_indices = @transform_17, window_bounds = array<i64: 8, 128>}, {transform_indices = @transform_18, window_bounds = array<i64: 8, 128>}]} {
    %c0 = arith.constant 0 : index
    %c0_0 = arith.constant 0 : index
    %0 = vector.load %arg1[%c0, %c0_0] : memref<8x16xf32, #tpu.memory_space<vmem>>, vector<8x16xf32>
    %1 = arith.truncf %0 : vector<8x16xf32> to vector<8x16xbf16>
    %c0_1 = arith.constant 0 : index
    %c0_2 = arith.constant 0 : index
    %2 = vector.load %arg4[%c0_1, %c0_2] : memref<16x256xbf16, #tpu.memory_space<vmem>>, vector<16x256xbf16>
    %cst = arith.constant dense<0.000000e+00> : vector<8x256xf32>
    %3 = tpu.matmul %1, %2, %cst {dimension_numbers = #tpu.dot_dimension_numbers<[1], [0], [0], [1], [0, 0, 1, 1], [], []>} : vector<8x16xbf16>, vector<16x256xbf16>, vector<8x256xf32> -> vector<8x256xf32>
    %c0_3 = arith.constant 0 : index
    %c0_4 = arith.constant 0 : index
    %4 = vector.load %arg5[%c0_3, %c0_4] : memref<1x256xf32, #tpu.memory_space<vmem>>, vector<1x256xf32>
    %5 = vector.broadcast %4 : vector<1x256xf32> to vector<8x256xf32>
    %6 = arith.addf %3, %5 : vector<8x256xf32>
    %cst_5 = arith.constant 0.000000e+00 : f32
    %7 = vector.broadcast %cst_5 : f32 to vector<8x256xf32>
    %8 = arith.maximumf %6, %7 : vector<8x256xf32>
    %9 = arith.truncf %8 : vector<8x256xf32> to vector<8x256xbf16>
    %c0_6 = arith.constant 0 : index
    %c0_7 = arith.constant 0 : index
    %10 = vector.load %arg6[%c0_6, %c0_7] : memref<256x128xbf16, #tpu.memory_space<vmem>>, vector<256x128xbf16>
    %cst_8 = arith.constant dense<0.000000e+00> : vector<8x128xf32>
    %11 = tpu.matmul %9, %10, %cst_8 {dimension_numbers = #tpu.dot_dimension_numbers<[1], [0], [0], [1], [0, 0, 1, 1], [], []>} : vector<8x256xbf16>, vector<256x128xbf16>, vector<8x128xf32> -> vector<8x128xf32>
    %c0_9 = arith.constant 0 : index
    %c0_10 = arith.constant 0 : index
    %12 = vector.load %arg7[%c0_9, %c0_10] : memref<1x128xf32, #tpu.memory_space<vmem>>, vector<1x128xf32>
    %13 = vector.broadcast %12 : vector<1x128xf32> to vector<8x128xf32>
    %14 = arith.addf %11, %13 : vector<8x128xf32>
    %c0_11 = arith.constant 0 : index
    %c0_12 = arith.constant 0 : index
    %15 = vector.load %arg2[%c0_11, %c0_12] : memref<8x16xf32, #tpu.memory_space<vmem>>, vector<8x16xf32>
    %16 = arith.truncf %15 : vector<8x16xf32> to vector<8x16xbf16>
    %c0_13 = arith.constant 0 : index
    %c0_14 = arith.constant 0 : index
    %17 = vector.load %arg4[%c0_13, %c0_14] : memref<16x256xbf16, #tpu.memory_space<vmem>>, vector<16x256xbf16>
    %cst_15 = arith.constant dense<0.000000e+00> : vector<8x256xf32>
    %18 = tpu.matmul %16, %17, %cst_15 {dimension_numbers = #tpu.dot_dimension_numbers<[1], [0], [0], [1], [0, 0, 1, 1], [], []>} : vector<8x16xbf16>, vector<16x256xbf16>, vector<8x256xf32> -> vector<8x256xf32>
    %c0_16 = arith.constant 0 : index
    %c0_17 = arith.constant 0 : index
    %19 = vector.load %arg5[%c0_16, %c0_17] : memref<1x256xf32, #tpu.memory_space<vmem>>, vector<1x256xf32>
    %20 = vector.broadcast %19 : vector<1x256xf32> to vector<8x256xf32>
    %21 = arith.addf %18, %20 : vector<8x256xf32>
    %cst_18 = arith.constant 0.000000e+00 : f32
    %22 = vector.broadcast %cst_18 : f32 to vector<8x256xf32>
    %23 = arith.maximumf %21, %22 : vector<8x256xf32>
    %24 = arith.truncf %23 : vector<8x256xf32> to vector<8x256xbf16>
    %c0_19 = arith.constant 0 : index
    %c0_20 = arith.constant 0 : index
    %25 = vector.load %arg6[%c0_19, %c0_20] : memref<256x128xbf16, #tpu.memory_space<vmem>>, vector<256x128xbf16>
    %cst_21 = arith.constant dense<0.000000e+00> : vector<8x128xf32>
    %26 = tpu.matmul %24, %25, %cst_21 {dimension_numbers = #tpu.dot_dimension_numbers<[1], [0], [0], [1], [0, 0, 1, 1], [], []>} : vector<8x256xbf16>, vector<256x128xbf16>, vector<8x128xf32> -> vector<8x128xf32>
    %c0_22 = arith.constant 0 : index
    %c0_23 = arith.constant 0 : index
    %27 = vector.load %arg7[%c0_22, %c0_23] : memref<1x128xf32, #tpu.memory_space<vmem>>, vector<1x128xf32>
    %28 = vector.broadcast %27 : vector<1x128xf32> to vector<8x128xf32>
    %29 = arith.addf %26, %28 : vector<8x128xf32>
    %c0_24 = arith.constant 0 : index
    %c0_25 = arith.constant 0 : index
    %30 = vector.load %arg19[%c0_24, %c0_25] : memref<8x128xf32, #tpu.memory_space<vmem>>, vector<8x128xf32>
    tpu.vector_store %arg19[%c0_24, %c0_25], %29 {strides = array<i32>} : memref<8x128xf32, #tpu.memory_space<vmem>>, vector<8x128xf32>,
    %31 = arith.truncf %14 : vector<8x128xf32> to vector<8x128xbf16>
    %c0_26 = arith.constant 0 : index
    %c0_27 = arith.constant 0 : index
    %32 = vector.load %arg8[%c0_26, %c0_27] : memref<128x512xbf16, #tpu.memory_space<vmem>>, vector<128x512xbf16>
    %cst_28 = arith.constant dense<0.000000e+00> : vector<8x512xf32>
    %33 = tpu.matmul %31, %32, %cst_28 {dimension_numbers = #tpu.dot_dimension_numbers<[1], [0], [0], [1], [0, 0, 1, 1], [], []>} : vector<8x128xbf16>, vector<128x512xbf16>, vector<8x512xf32> -> vector<8x512xf32>
    %34 = vector.extract_strided_slice %33 {offsets = [0, 0], sizes = [8, 256], strides = [1, 1]} : vector<8x512xf32> to vector<8x256xf32>
    %35 = arith.truncf %29 : vector<8x128xf32> to vector<8x128xbf16>
    %c0_29 = arith.constant 0 : index
    %c0_30 = arith.constant 0 : index
    %36 = vector.load %arg9[%c0_29, %c0_30] : memref<128x256xbf16, #tpu.memory_space<vmem>>, vector<128x256xbf16>
    %cst_31 = arith.constant dense<0.000000e+00> : vector<8x256xf32>
    %37 = tpu.matmul %35, %36, %cst_31 {dimension_numbers = #tpu.dot_dimension_numbers<[1], [0], [0], [1], [0, 0, 1, 1], [], []>} : vector<8x128xbf16>, vector<128x256xbf16>, vector<8x256xf32> -> vector<8x256xf32>
    %38 = arith.addf %34, %37 : vector<8x256xf32>
    %c0_32 = arith.constant 0 : index
    %c0_33 = arith.constant 0 : index
    %39 = vector.load %arg10[%c0_32, %c0_33] : memref<1x256xf32, #tpu.memory_space<vmem>>, vector<1x256xf32>
    %40 = vector.broadcast %39 : vector<1x256xf32> to vector<8x256xf32>
    %41 = arith.addf %38, %40 : vector<8x256xf32>
    %cst_34 = arith.constant 0.000000e+00 : f32
    %42 = vector.broadcast %cst_34 : f32 to vector<8x256xf32>
    %43 = arith.maximumf %41, %42 : vector<8x256xf32>
    %44 = arith.truncf %43 : vector<8x256xf32> to vector<8x256xbf16>
    %c0_35 = arith.constant 0 : index
    %c0_36 = arith.constant 0 : index
    %45 = vector.load %arg11[%c0_35, %c0_36] : memref<256x128xbf16, #tpu.memory_space<vmem>>, vector<256x128xbf16>
    %cst_37 = arith.constant dense<0.000000e+00> : vector<8x128xf32>
    %46 = tpu.matmul %44, %45, %cst_37 {dimension_numbers = #tpu.dot_dimension_numbers<[1], [0], [0], [1], [0, 0, 1, 1], [], []>} : vector<8x256xbf16>, vector<256x128xbf16>, vector<8x128xf32> -> vector<8x128xf32>
    %c0_38 = arith.constant 0 : index
    %c0_39 = arith.constant 0 : index
    %47 = vector.load %arg12[%c0_38, %c0_39] : memref<1x128xf32, #tpu.memory_space<vmem>>, vector<1x128xf32>
    %48 = vector.broadcast %47 : vector<1x128xf32> to vector<8x128xf32>
    %49 = arith.addf %46, %48 : vector<8x128xf32>
    %c0_40 = arith.constant 0 : index
    %c0_41 = arith.constant 0 : index
    %50 = vector.load %arg17[%c0_40, %c0_41] : memref<8x128xf32, #tpu.memory_space<vmem>>, vector<8x128xf32>
    tpu.vector_store %arg17[%c0_40, %c0_41], %49 {strides = array<i32>} : memref<8x128xf32, #tpu.memory_space<vmem>>, vector<8x128xf32>,
    %51 = vector.extract_strided_slice %33 {offsets = [0, 256], sizes = [8, 256], strides = [1, 1]} : vector<8x512xf32> to vector<8x256xf32>
    %c0_42 = arith.constant 0 : index
    %c0_43 = arith.constant 0 : index
    %52 = vector.load %arg3[%c0_42, %c0_43] : memref<8x4xf32, #tpu.memory_space<vmem>>, vector<8x4xf32>
    %53 = arith.truncf %52 : vector<8x4xf32> to vector<8x4xbf16>
    %c0_44 = arith.constant 0 : index
    %c0_45 = arith.constant 0 : index
    %54 = vector.load %arg13[%c0_44, %c0_45] : memref<4x256xbf16, #tpu.memory_space<vmem>>, vector<4x256xbf16>
    %cst_46 = arith.constant dense<0.000000e+00> : vector<8x256xf32>
    %55 = tpu.matmul %53, %54, %cst_46 {dimension_numbers = #tpu.dot_dimension_numbers<[1], [0], [0], [1], [0, 0, 1, 1], [], []>} : vector<8x4xbf16>, vector<4x256xbf16>, vector<8x256xf32> -> vector<8x256xf32>
    %56 = arith.addf %51, %55 : vector<8x256xf32>
    %c0_47 = arith.constant 0 : index
    %c0_48 = arith.constant 0 : index
    %57 = vector.load %arg14[%c0_47, %c0_48] : memref<1x256xf32, #tpu.memory_space<vmem>>, vector<1x256xf32>
    %58 = vector.broadcast %57 : vector<1x256xf32> to vector<8x256xf32>
    %59 = arith.addf %56, %58 : vector<8x256xf32>
    %cst_49 = arith.constant 0.000000e+00 : f32
    %60 = vector.broadcast %cst_49 : f32 to vector<8x256xf32>
    %61 = arith.maximumf %59, %60 : vector<8x256xf32>
    %62 = arith.truncf %61 : vector<8x256xf32> to vector<8x256xbf16>
    %c0_50 = arith.constant 0 : index
    %c0_51 = arith.constant 0 : index
    %63 = vector.load %arg15[%c0_50, %c0_51] : memref<256x128xbf16, #tpu.memory_space<vmem>>, vector<256x128xbf16>
    %cst_52 = arith.constant dense<0.000000e+00> : vector<8x128xf32>
    %64 = tpu.matmul %62, %63, %cst_52 {dimension_numbers = #tpu.dot_dimension_numbers<[1], [0], [0], [1], [0, 0, 1, 1], [], []>} : vector<8x256xbf16>, vector<256x128xbf16>, vector<8x128xf32> -> vector<8x128xf32>
    %c0_53 = arith.constant 0 : index
    %c0_54 = arith.constant 0 : index
    %65 = vector.load %arg16[%c0_53, %c0_54] : memref<1x128xf32, #tpu.memory_space<vmem>>, vector<1x128xf32>
    %66 = vector.broadcast %65 : vector<1x128xf32> to vector<8x128xf32>
    %67 = arith.addf %64, %66 : vector<8x128xf32>
    %c0_55 = arith.constant 0 : index
    %c0_56 = arith.constant 0 : index
    %68 = vector.load %arg18[%c0_55, %c0_56] : memref<8x128xf32, #tpu.memory_space<vmem>>, vector<8x128xf32>
    tpu.vector_store %arg18[%c0_55, %c0_56], %67 {strides = array<i32>} : memref<8x128xf32, #tpu.memory_space<vmem>>, vector<8x128xf32>,
    return
  }
  func.func @transform_0(%arg0: i32) -> (i32, i32) {
    %c0_i32 = arith.constant 0 : i32
    %c0_i32_0 = arith.constant 0 : i32
    return %arg0, %c0_i32 : i32, i32
  }
  func.func @transform_1(%arg0: i32) -> (i32, i32) {
    %c0_i32 = arith.constant 0 : i32
    %c0_i32_0 = arith.constant 0 : i32
    return %arg0, %c0_i32 : i32, i32
  }
  func.func @transform_2(%arg0: i32) -> (i32, i32) {
    %c0_i32 = arith.constant 0 : i32
    %c0_i32_0 = arith.constant 0 : i32
    return %arg0, %c0_i32 : i32, i32
  }
  func.func @transform_3(%arg0: i32) -> (i32, i32) {
    %c0_i32 = arith.constant 0 : i32
    %c0_i32_0 = arith.constant 0 : i32
    %c0_i32_1 = arith.constant 0 : i32
    return %c0_i32, %c0_i32_0 : i32, i32
  }
  func.func @transform_4(%arg0: i32) -> (i32, i32) {
    %c0_i32 = arith.constant 0 : i32
    %c0_i32_0 = arith.constant 0 : i32
    %c0_i32_1 = arith.constant 0 : i32
    return %c0_i32, %c0_i32_0 : i32, i32
  }
  func.func @transform_5(%arg0: i32) -> (i32, i32) {
    %c0_i32 = arith.constant 0 : i32
    %c0_i32_0 = arith.constant 0 : i32
    %c0_i32_1 = arith.constant 0 : i32
    return %c0_i32, %c0_i32_0 : i32, i32
  }
  func.func @transform_6(%arg0: i32) -> (i32, i32) {
    %c0_i32 = arith.constant 0 : i32
    %c0_i32_0 = arith.constant 0 : i32
    %c0_i32_1 = arith.constant 0 : i32
    return %c0_i32, %c0_i32_0 : i32, i32
  }
  func.func @transform_7(%arg0: i32) -> (i32, i32) {
    %c0_i32 = arith.constant 0 : i32
    %c0_i32_0 = arith.constant 0 : i32
    %c0_i32_1 = arith.constant 0 : i32
    return %c0_i32, %c0_i32_0 : i32, i32
  }
  func.func @transform_8(%arg0: i32) -> (i32, i32) {
    %c0_i32 = arith.constant 0 : i32
    %c0_i32_0 = arith.constant 0 : i32
    %c0_i32_1 = arith.constant 0 : i32
    return %c0_i32, %c0_i32_0 : i32, i32
  }
  func.func @transform_9(%arg0: i32) -> (i32, i32) {
    %c0_i32 = arith.constant 0 : i32
    %c0_i32_0 = arith.constant 0 : i32
    %c0_i32_1 = arith.constant 0 : i32
    return %c0_i32, %c0_i32_0 : i32, i32
  }
  func.func @transform_10(%arg0: i32) -> (i32, i32) {
    %c0_i32 = arith.constant 0 : i32
    %c0_i32_0 = arith.constant 0 : i32
    %c0_i32_1 = arith.constant 0 : i32
    return %c0_i32, %c0_i32_0 : i32, i32
  }
  func.func @transform_11(%arg0: i32) -> (i32, i32) {
    %c0_i32 = arith.constant 0 : i32
    %c0_i32_0 = arith.constant 0 : i32
    %c0_i32_1 = arith.constant 0 : i32
    return %c0_i32, %c0_i32_0 : i32, i32
  }
  func.func @transform_12(%arg0: i32) -> (i32, i32) {
    %c0_i32 = arith.constant 0 : i32
    %c0_i32_0 = arith.constant 0 : i32
    %c0_i32_1 = arith.constant 0 : i32
    return %c0_i32, %c0_i32_0 : i32, i32
  }
  func.func @transform_13(%arg0: i32) -> (i32, i32) {
    %c0_i32 = arith.constant 0 : i32
    %c0_i32_0 = arith.constant 0 : i32
    %c0_i32_1 = arith.constant 0 : i32
    return %c0_i32, %c0_i32_0 : i32, i32
  }
  func.func @transform_14(%arg0: i32) -> (i32, i32) {
    %c0_i32 = arith.constant 0 : i32
    %c0_i32_0 = arith.constant 0 : i32
    %c0_i32_1 = arith.constant 0 : i32
    return %c0_i32, %c0_i32_0 : i32, i32
  }
  func.func @transform_15(%arg0: i32) -> (i32, i32) {
    %c0_i32 = arith.constant 0 : i32
    %c0_i32_0 = arith.constant 0 : i32
    %c0_i32_1 = arith.constant 0 : i32
    return %c0_i32, %c0_i32_0 : i32, i32
  }
  func.func @transform_16(%arg0: i32) -> (i32, i32) {
    %c0_i32 = arith.constant 0 : i32
    %c0_i32_0 = arith.constant 0 : i32
    return %arg0, %c0_i32 : i32, i32
  }
  func.func @transform_17(%arg0: i32) -> (i32, i32) {
    %c0_i32 = arith.constant 0 : i32
    %c0_i32_0 = arith.constant 0 : i32
    return %arg0, %c0_i32 : i32, i32
  }
  func.func @transform_18(%arg0: i32) -> (i32, i32) {
    %c0_i32 = arith.constant 0 : i32
    %c0_i32_0 = arith.constant 0 : i32
    return %arg0, %c0_i32 : i32, i32
  }
}

</mosaic_0001>

<llo_original>
// kernel: icm_forward.1
$region0: #{icm_forward.1}
  #allocation0 [shape = 'u32[]', space=smem, size = 0x4, offset = 0x4, fixed_abs, tag = 'smem constant byte address 0x4 - core index']
  #allocation1 [shape = 'u32[144,128]{1,0:T(1,128)}', space=vmem, size = 0x12000, scoped, tag = 'internal scratch']
  %s0 = inlined_call_operand.vmem [shape: f32[8,16], index: 0, kind: input, shape index: {}]
  %s1 = inlined_call_operand.vmem [shape: f32[8,16], index: 1, kind: input, shape index: {}]
  %s2 = inlined_call_operand.vmem [shape: f32[8,4], index: 2, kind: input, shape index: {}]
  %s3 = inlined_call_operand.vmem [shape: bf16[16,256], index: 3, kind: input, shape index: {}]
  %s4 = inlined_call_operand.vmem [shape: f32[1,256], index: 4, kind: input, shape index: {}]
  %s5 = inlined_call_operand.hbm [shape: bf16[256,128], index: 5, kind: input, shape index: {}]
  %s6 = inlined_call_operand.hbm [shape: f32[1,128], index: 6, kind: input, shape index: {}]
  %s7 = inlined_call_operand.hbm [shape: bf16[128,512], index: 7, kind: input, shape index: {}]
  %s8 = inlined_call_operand.hbm [shape: bf16[128,256], index: 8, kind: input, shape index: {}]
  %s9 = inlined_call_operand.vmem [shape: f32[1,256], index: 9, kind: input, shape index: {}]
  %s10 = inlined_call_operand.hbm [shape: bf16[256,128], index: 10, kind: input, shape index: {}]
  %s11 = inlined_call_operand.vmem [shape: f32[1,128], index: 11, kind: input, shape index: {}]
  %s12 = inlined_call_operand.hbm [shape: bf16[4,256], index: 12, kind: input, shape index: {}]
  %s13 = inlined_call_operand.hbm [shape: f32[1,256], index: 13, kind: input, shape index: {}]
  %s14 = inlined_call_operand.hbm [shape: bf16[256,128], index: 14, kind: input, shape index: {}]
  %s15 = inlined_call_operand.hbm [shape: f32[1,128], index: 15, kind: input, shape index: {}]
  %s16 = inlined_call_operand.vmem [shape: f32[8,128], index: 16, kind: output, shape index: {0}]
  %s17 = inlined_call_operand.hbm [shape: f32[8,128], index: 17, kind: output, shape index: {1}]
  %s18 = inlined_call_operand.hbm [shape: f32[8,128], index: 18, kind: output, shape index: {2}]
  %19 = xla_tuple %s16, %s17, %s18
  %s20 = sld [smem:[#allocation0]]
  $region126: #{icm_forward.1} parent=0
    _
  %s22 = ssub.s32 1, %s20
  %s23 = scalar_select 0, %s22, %s20
  $region1: #{icm_forward.1} parent=0
    #allocation2 [shape = 'u8[65536]{0}', space=vmem, size = 0x10000, scoped, tag = 'input window, operand 5, single buffered']
    #allocation3 [shape = 's32[1]{0}', space=sflag, size = 0x4, scoped, tag = 'scoped memory for icm_forward.1']
    #allocation4 [shape = 's32[1]{0}', space=sflag, size = 0x4, scoped, tag = 'scoped memory for icm_forward.1']
    #allocation5 [shape = 'u8[512]{0}', space=vmem, size = 0x400, scoped, tag = 'input window, operand 6, single buffered']
    #allocation6 [shape = 's32[1]{0}', space=sflag, size = 0x4, scoped, tag = 'scoped memory for icm_forward.1']
    #allocation7 [shape = 'u8[131072]{0}', space=vmem, size = 0x20000, scoped, tag = 'input window, operand 7, single buffered']
    #allocation8 [shape = 'u8[65536]{0}', space=vmem, size = 0x10000, scoped, tag = 'input window, operand 8, single buffered']
    #allocation9 [shape = 's32[1]{0}', space=sflag, size = 0x4, scoped, tag = 'scoped memory for icm_forward.1']
    #allocation10 [shape = 'u8[65536]{0}', space=vmem, size = 0x10000, scoped, tag = 'input window, operand 10, single buffered']
    #allocation11 [shape = 'u8[2048]{0}', space=vmem, size = 0x800, scoped, tag = 'input window, operand 12, single buffered']
    #allocation12 [shape = 's32[1]{0}', space=sflag, size = 0x4, scoped, tag = 'scoped memory for icm_forward.1']
    #allocation13 [shape = 'u8[1024]{0}', space=vmem, size = 0x400, scoped, tag = 'input window, operand 13, single buffered']
    #allocation14 [shape = 'u8[65536]{0}', space=vmem, size = 0x10000, scoped, tag = 'input window, operand 14, single buffered']
    #allocation15 [shape = 's32[1]{0}', space=sflag, size = 0x4, scoped, tag = 'scoped memory for icm_forward.1']
    #allocation16 [shape = 'u8[512]{0}', space=vmem, size = 0x400, scoped, tag = 'input window, operand 15, single buffered']
    #allocation17 [shape = 'u8[4096]{0}', space=vmem, size = 0x1000, scoped, tag = 'output window, operand 1, single buffered']
    #allocation18 [shape = 'u8[4096]{0}', space=vmem, size = 0x1000, scoped, tag = 'output window, operand 2, single buffered']
    #allocation19 [shape = 's32[1]{0}', space=sflag, size = 0x4, scoped, tag = 'scoped memory for icm_forward.1']
    %24 = vsyncpa [#allocation3], 0
    %25 = vsyncpa [#allocation6], 0
    %26 = vsyncpa [#allocation9], 0
    %27 = vsyncpa [#allocation12], 0
    %28 = vsyncpa [#allocation15], 0
    %29 = vsyncpa [#allocation4], 0
    %30 = vsyncpa [#allocation19], 0
    // Predicated region
    $region2: #{icm_forward.1} parent=1 // pred_check
      _
    $region3: #{icm_forward.1} parent=1 // pred_check_branch
      %32 = sbr.rel (0) target = $region5
    $region4: #{icm_forward.1} parent=1 // pred_region
      _
    $region5: #{icm_forward.1} parent=1 // pred_fallthru
      _
    // Predicated region
    $region6: #{icm_forward.1} parent=1 // pred_check
      _
    $region7: #{icm_forward.1} parent=1 // pred_check_branch
      %34 = sbr.rel (0) target = $region9
    $region8: #{icm_forward.1} parent=1 // pred_region
      _
    $region9: #{icm_forward.1} parent=1 // pred_fallthru
      _
    // Predicated region
    $region10: #{icm_forward.1} parent=1 // pred_check
      _
    $region11: #{icm_forward.1} parent=1 // pred_check_branch
      %36 = sbr.rel (0) target = $region13
    $region12: #{icm_forward.1} parent=1 // pred_region
      _
    $region13: #{icm_forward.1} parent=1 // pred_fallthru
      _
    // Predicated region
    $region14: #{icm_forward.1} parent=1 // pred_check
      _
    $region15: #{icm_forward.1} parent=1 // pred_check_branch
      %38 = sbr.rel (0) target = $region17
    $region16: #{icm_forward.1} parent=1 // pred_region
      _
    $region17: #{icm_forward.1} parent=1 // pred_fallthru
      _
    // Predicated region
    $region18: #{icm_forward.1} parent=1 // pred_check
      _
    $region19: #{icm_forward.1} parent=1 // pred_check_branch
      %40 = sbr.rel (0) target = $region21
    $region20: #{icm_forward.1} parent=1 // pred_region
      _
    $region21: #{icm_forward.1} parent=1 // pred_fallthru
      _
    // Predicated region
    $region22: #{icm_forward.1} parent=1 // pred_check
      _
    $region23: #{icm_forward.1} parent=1 // pred_check_branch
      %42 = sbr.rel (0) target = $region25
    $region24: #{icm_forward.1} parent=1 // pred_region
      %s44 = ssub.s32 2048, 2048
      %45 = vsyncadd [#allocation3], %s44
      %s46 = sshll.u32 [#allocation2], 4
      %s47 = int_to_ptr.vmem [resolvable:$true] %s46
      %52 = dma.hbm_to_vmem [thread:$0]  %s5, 2048, %s47, [#allocation3], 64, 64, 4
    $region25: #{icm_forward.1} parent=1 // pred_fallthru
      _
    // Predicated region
    $region26: #{icm_forward.1} parent=1 // pred_check
      _
    $region27: #{icm_forward.1} parent=1 // pred_check_branch
      %54 = sbr.rel (0) target = $region29
    $region28: #{icm_forward.1} parent=1 // pred_region
      %s56 = ssub.s32 16, 16
      %57 = vsyncadd [#allocation6], %s56
      %s59 = sshll.u32 [#allocation5], 4
      %s60 = int_to_ptr.vmem [resolvable:$true] %s59
      %62 = dma.hbm_to_vmem [thread:$0]  %s6, 16, %s60, [#allocation6]
    $region29: #{icm_forward.1} parent=1 // pred_fallthru
      _
    // Predicated region
    $region30: #{icm_forward.1} parent=1 // pred_check
      _
    $region31: #{icm_forward.1} parent=1 // pred_check_branch
      %64 = sbr.rel (0) target = $region33
    $region32: #{icm_forward.1} parent=1 // pred_region
      %s66 = ssub.s32 4096, 4096
      %67 = vsyncadd [#allocation6], %s66
      %s68 = sshll.u32 [#allocation7], 4
      %s69 = int_to_ptr.vmem [resolvable:$true] %s68
      %74 = dma.hbm_to_vmem [thread:$0]  %s7, 4096, %s69, [#allocation6], 256, 256, 16
    $region33: #{icm_forward.1} parent=1 // pred_fallthru
      _
    // Predicated region
    $region34: #{icm_forward.1} parent=1 // pred_check
      _
    $region35: #{icm_forward.1} parent=1 // pred_check_branch
      %76 = sbr.rel (0) target = $region37
    $region36: #{icm_forward.1} parent=1 // pred_region
      %s78 = ssub.s32 2048, 2048
      %79 = vsyncadd [#allocation9], %s78
      %s80 = sshll.u32 [#allocation8], 4
      %s81 = int_to_ptr.vmem [resolvable:$true] %s80
      %86 = dma.hbm_to_vmem [thread:$0]  %s8, 2048, %s81, [#allocation9], 128, 128, 8
    $region37: #{icm_forward.1} parent=1 // pred_fallthru
      _
    // Predicated region
    $region38: #{icm_forward.1} parent=1 // pred_check
      _
    $region39: #{icm_forward.1} parent=1 // pred_check_branch
      %88 = sbr.rel (0) target = $region41
    $region40: #{icm_forward.1} parent=1 // pred_region
      _
    $region41: #{icm_forward.1} parent=1 // pred_fallthru
      _
    // Predicated region
    $region42: #{icm_forward.1} parent=1 // pred_check
      _
    $region43: #{icm_forward.1} parent=1 // pred_check_branch
      %90 = sbr.rel (0) target = $region45
    $region44: #{icm_forward.1} parent=1 // pred_region
      %s92 = ssub.s32 2048, 2048
      %93 = vsyncadd [#allocation9], %s92
      %s94 = sshll.u32 [#allocation10], 4
      %s95 = int_to_ptr.vmem [resolvable:$true] %s94
      %100 = dma.hbm_to_vmem [thread:$0]  %s10, 2048, %s95, [#allocation9], 64, 64, 4
    $region45: #{icm_forward.1} parent=1 // pred_fallthru
      _
    // Predicated region
    $region46: #{icm_forward.1} parent=1 // pred_check
      _
    $region47: #{icm_forward.1} parent=1 // pred_check_branch
      %102 = sbr.rel (0) target = $region49
    $region48: #{icm_forward.1} parent=1 // pred_region
      _
    $region49: #{icm_forward.1} parent=1 // pred_fallthru
      _
    // Predicated region
    $region50: #{icm_forward.1} parent=1 // pred_check
      _
    $region51: #{icm_forward.1} parent=1 // pred_check_branch
      %104 = sbr.rel (0) target = $region53
    $region52: #{icm_forward.1} parent=1 // pred_region
      %s106 = ssub.s32 64, 64
      %107 = vsyncadd [#allocation12], %s106
      %s109 = sshll.u32 [#allocation11], 4
      %s110 = int_to_ptr.vmem [resolvable:$true] %s109
      %112 = dma.hbm_to_vmem [thread:$0]  %s12, 64, %s110, [#allocation12]
    $region53: #{icm_forward.1} parent=1 // pred_fallthru
      _
    // Predicated region
    $region54: #{icm_forward.1} parent=1 // pred_check
      _
    $region55: #{icm_forward.1} parent=1 // pred_check_branch
      %114 = sbr.rel (0) target = $region57
    $region56: #{icm_forward.1} parent=1 // pred_region
      %s116 = ssub.s32 32, 32
      %117 = vsyncadd [#allocation12], %s116
      %s119 = sshll.u32 [#allocation13], 4
      %s120 = int_to_ptr.vmem [resolvable:$true] %s119
      %122 = dma.hbm_to_vmem [thread:$0]  %s13, 32, %s120, [#allocation12]
    $region57: #{icm_forward.1} parent=1 // pred_fallthru
      _
    // Predicated region
    $region58: #{icm_forward.1} parent=1 // pred_check
      _
    $region59: #{icm_forward.1} parent=1 // pred_check_branch
      %124 = sbr.rel (0) target = $region61
    $region60: #{icm_forward.1} parent=1 // pred_region
      %s126 = ssub.s32 2048, 2048
      %127 = vsyncadd [#allocation15], %s126
      %s128 = sshll.u32 [#allocation14], 4
      %s129 = int_to_ptr.vmem [resolvable:$true] %s128
      %134 = dma.hbm_to_vmem [thread:$0]  %s14, 2048, %s129, [#allocation15], 64, 64, 4
    $region61: #{icm_forward.1} parent=1 // pred_fallthru
      _
    // Predicated region
    $region62: #{icm_forward.1} parent=1 // pred_check
      _
    $region63: #{icm_forward.1} parent=1 // pred_check_branch
      %136 = sbr.rel (0) target = $region65
    $region64: #{icm_forward.1} parent=1 // pred_region
      %s138 = ssub.s32 16, 16
      %139 = vsyncadd [#allocation15], %s138
      %s141 = sshll.u32 [#allocation16], 4
      %s142 = int_to_ptr.vmem [resolvable:$true] %s141
      %144 = dma.hbm_to_vmem [thread:$0]  %s15, 16, %s142, [#allocation15]
    $region65: #{icm_forward.1} parent=1 // pred_fallthru
      _
    // Predicated region
    $region66: #{icm_forward.1} parent=1 // pred_check
      _
    $region67: #{icm_forward.1} parent=1 // pred_check_branch
      %146 = sbr.rel (0) target = $region69
    $region68: #{icm_forward.1} parent=1 // pred_region
      %147 = dma.done [#allocation3], 2048
    $region69: #{icm_forward.1} parent=1 // pred_fallthru
      _
    // Predicated region
    $region70: #{icm_forward.1} parent=1 // pred_check
      _
    $region71: #{icm_forward.1} parent=1 // pred_check_branch
      %149 = sbr.rel (0) target = $region73
    $region72: #{icm_forward.1} parent=1 // pred_region
      %150 = dma.done [#allocation6], 16
    $region73: #{icm_forward.1} parent=1 // pred_fallthru
      _
    // Predicated region
    $region74: #{icm_forward.1} parent=1 // pred_check
      _
    $region75: #{icm_forward.1} parent=1 // pred_check_branch
      %152 = sbr.rel (0) target = $region77
    $region76: #{icm_forward.1} parent=1 // pred_region
      %153 = dma.done [#allocation6], 4096
    $region77: #{icm_forward.1} parent=1 // pred_fallthru
      _
    // Predicated region
    $region78: #{icm_forward.1} parent=1 // pred_check
      _
    $region79: #{icm_forward.1} parent=1 // pred_check_branch
      %155 = sbr.rel (0) target = $region81
    $region80: #{icm_forward.1} parent=1 // pred_region
      %156 = dma.done [#allocation9], 2048
    $region81: #{icm_forward.1} parent=1 // pred_fallthru
      _
    // Predicated region
    $region82: #{icm_forward.1} parent=1 // pred_check
      _
    $region83: #{icm_forward.1} parent=1 // pred_check_branch
      %158 = sbr.rel (0) target = $region85
    $region84: #{icm_forward.1} parent=1 // pred_region
      %159 = dma.done [#allocation9], 2048
    $region85: #{icm_forward.1} parent=1 // pred_fallthru
      _
    // Predicated region
    $region86: #{icm_forward.1} parent=1 // pred_check
      _
    $region87: #{icm_forward.1} parent=1 // pred_check_branch
      %161 = sbr.rel (0) target = $region89
    $region88: #{icm_forward.1} parent=1 // pred_region
      %162 = dma.done [#allocation12], 64
    $region89: #{icm_forward.1} parent=1 // pred_fallthru
      _
    // Predicated region
    $region90: #{icm_forward.1} parent=1 // pred_check
      _
    $region91: #{icm_forward.1} parent=1 // pred_check_branch
      %164 = sbr.rel (0) target = $region93
    $region92: #{icm_forward.1} parent=1 // pred_region
      %165 = dma.done [#allocation12], 32
    $region93: #{icm_forward.1} parent=1 // pred_fallthru
      _
    // Predicated region
    $region94: #{icm_forward.1} parent=1 // pred_check
      _
    $region95: #{icm_forward.1} parent=1 // pred_check_branch
      %167 = sbr.rel (0) target = $region97
    $region96: #{icm_forward.1} parent=1 // pred_region
      %168 = dma.done [#allocation15], 2048
    $region97: #{icm_forward.1} parent=1 // pred_fallthru
      _
    // Predicated region
    $region98: #{icm_forward.1} parent=1 // pred_check
      _
    $region99: #{icm_forward.1} parent=1 // pred_check_branch
      %170 = sbr.rel (0) target = $region101
    $region100: #{icm_forward.1} parent=1 // pred_region
      %171 = dma.done [#allocation15], 16
    $region101: #{icm_forward.1} parent=1 // pred_fallthru
      _
    %v173 = vld [vmem:[%s0] sm:$0xff]
    %v174 = vpack.c.bf16 %v173, %v173
    %v175 = vld [vmem:[%s3] sm:$0xff]
    %v176 = vld [vmem:[%s3 + $0x8] sm:$0xff]
    %v177 = vld [vmem:[%s4] sm:$0x3]
    %v179 = vlaneseq
    %v180 = vshrl.u32 %v179, 7
    %v181 = vsub.s32 0, %v180
    %v182 = vrot.slane %v177, %v181
    %v183 = vlaneseq
    %v184 = vshrl.u32 %v183, 7
    %v185 = vsub.s32 1, %v184
    %v186 = vrot.slane %v177, %v185
    %v191 = vunpack.c.l.b16 %v175
    %v192 = vunpack.c.h.b16 %v175
    %v193 = vunpack.c.l.b16 %v176
    %v194 = vunpack.c.h.b16 %v176
    %v195 = vpack.c.b16 %v193, %v191
    %v196 = vpack.c.b16 %v194, %v192
    %vm199 = vcmask 130048
    %v201 = vsel %vm199, %v174, 0
    %203 = vmatprep.subr.bf16.mxu0 %v196
    %204 = vmatpush1.bf16.msra.mxu0 %v195
    %205 = vmatprep.subr.bf16.mxu0 0
    %206 = vmatpush1.bf16.msra.mxu0 0
    %207 = vmatprep.subr.bf16.mxu0 0
    %208 = vmatpush1.bf16.msra.mxu0 0
    %209 = vmatprep.subr.bf16.mxu0 0
    %210 = vmatpush1.bf16.msra.mxu0 0
    %211 = vmatprep.subr.bf16.mxu0 0
    %212 = vmatpush1.bf16.msra.mxu0 0
    %213 = vmatprep.subr.bf16.mxu0 0
    %214 = vmatpush1.bf16.msra.mxu0 0
    %215 = vmatprep.subr.bf16.mxu0 0
    %216 = vmatpush1.bf16.msra.mxu0 0
    %217 = vmatprep.subr.bf16.mxu0 0
    %218 = vmatpush1.bf16.msra.mxu0 0
    %219 = vmatprep.subr.bf16.mxu0 0
    %220 = vmatpush1.bf16.msra.mxu0 0
    %221 = vmatprep.subr.bf16.mxu0 0
    %222 = vmatpush1.bf16.msra.mxu0 0
    %223 = vmatprep.subr.bf16.mxu0 0
    %224 = vmatpush1.bf16.msra.mxu0 0
    %225 = vmatprep.subr.bf16.mxu0 0
    %226 = vmatpush1.bf16.msra.mxu0 0
    %227 = vmatprep.subr.bf16.mxu0 0
    %228 = vmatpush1.bf16.msra.mxu0 0
    %229 = vmatprep.subr.bf16.mxu0 0
    %230 = vmatpush1.bf16.msra.mxu0 0
    %231 = vmatprep.subr.bf16.mxu0 0
    %232 = vmatpush1.bf16.msra.mxu0 0
    %233 = vmatprep.subr.bf16.mxu0 0
    %234 = vmatpush1.bf16.msra.mxu0 0
    %235 = vmatprep.mubr.bf16.mxu0 0
    %236 = vmatmul.mubr.bf16.gmra.mrb[0].mxu0 %v201
    %v237 = vpop.f32.mrb[0].mxu0
    %v238 = vadd.f32 %v182, %v237
    %v239 = vpop.f32.mrb[0].mxu0
    %v240 = vadd.f32 %v186, %v239
    %v241 = vpop.f32.mrb[0].mxu0
    %v242 = vpop.f32.mrb[0].mxu0
    %243 = vdwg.mxu0
    %v244 = vmax.f32 %v238, 0.0
    %v245 = vmax.f32 %v240, 0.0
    %v246 = vpack.c.bf16 %v244, %v244
    %v247 = vpack.c.bf16 %v245, %v245
    %v248 = vld [vmem:[#allocation2] sm:$0xf]
    %v249 = vld [vmem:[#allocation2 + $0x4] sm:$0xf]
    %v250 = vld [vmem:[#allocation2 + $0x8] sm:$0xf]
    %v251 = vld [vmem:[#allocation2 + $0xc] sm:$0xf]
    %v252 = vld [vmem:[#allocation2 + $0x10] sm:$0xf]
    %v253 = vld [vmem:[#allocation2 + $0x14] sm:$0xf]
    %v254 = vld [vmem:[#allocation2 + $0x18] sm:$0xf]
    %v255 = vld [vmem:[#allocation2 + $0x1c] sm:$0xf]
    %v256 = vld [vmem:[#allocation2 + $0x20] sm:$0xf]
    %v257 = vld [vmem:[#allocation2 + $0x24] sm:$0xf]
    %v258 = vld [vmem:[#allocation2 + $0x28] sm:$0xf]
    %v259 = vld [vmem:[#allocation2 + $0x2c] sm:$0xf]
    %v260 = vld [vmem:[#allocation2 + $0x30] sm:$0xf]
    %v261 = vld [vmem:[#allocation2 + $0x34] sm:$0xf]
    %v262 = vld [vmem:[#allocation2 + $0x38] sm:$0xf]
    %v263 = vld [vmem:[#allocation2 + $0x3c] sm:$0xf]
    %v264 = vld [vmem:[#allocation2 + $0x40] sm:$0xf]
    %v265 = vld [vmem:[#allocation2 + $0x44] sm:$0xf]
    %v266 = vld [vmem:[#allocation2 + $0x48] sm:$0xf]
    %v267 = vld [vmem:[#allocation2 + $0x4c] sm:$0xf]
    %v268 = vld [vmem:[#allocation2 + $0x50] sm:$0xf]
    %v269 = vld [vmem:[#allocation2 + $0x54] sm:$0xf]
    %v270 = vld [vmem:[#allocation2 + $0x58] sm:$0xf]
    %v271 = vld [vmem:[#allocation2 + $0x5c] sm:$0xf]
    %v272 = vld [vmem:[#allocation2 + $0x60] sm:$0xf]
    %v273 = vld [vmem:[#allocation2 + $0x64] sm:$0xf]
    %v274 = vld [vmem:[#allocation2 + $0x68] sm:$0xf]
    %v275 = vld [vmem:[#allocation2 + $0x6c] sm:$0xf]
    %v276 = vld [vmem:[#allocation2 + $0x70] sm:$0xf]
    %v277 = vld [vmem:[#allocation2 + $0x74] sm:$0xf]
    %v278 = vld [vmem:[#allocation2 + $0x78] sm:$0xf]
    %v279 = vld [vmem:[#allocation2 + $0x7c] sm:$0xf]
    %v280 = vld [vmem:[#allocation5] sm:$0x1]
    %v282 = vlaneseq
    %v283 = vshrl.u32 %v282, 7
    %v284 = vsub.s32 0, %v283
    %v285 = vrot.slane %v280, %v284
    %v319 = vunpack.c.l.b16 %v248
    %v320 = vunpack.c.l.b16 %v249
    %v321 = vunpack.c.l.b16 %v250
    %v322 = vunpack.c.l.b16 %v251
    %v323 = vunpack.c.l.b16 %v252
    %v324 = vunpack.c.l.b16 %v253
    %v325 = vunpack.c.l.b16 %v254
    %v326 = vunpack.c.l.b16 %v255
    %v327 = vunpack.c.l.b16 %v256
    %v328 = vunpack.c.l.b16 %v257
    %v329 = vunpack.c.l.b16 %v258
    %v330 = vunpack.c.l.b16 %v259
    %v331 = vunpack.c.l.b16 %v260
    %v332 = vunpack.c.l.b16 %v261
    %v333 = vunpack.c.l.b16 %v262
    %v334 = vunpack.c.l.b16 %v263
    %v335 = vunpack.c.l.b16 %v264
    %v336 = vunpack.c.l.b16 %v265
    %v337 = vunpack.c.l.b16 %v266
    %v338 = vunpack.c.l.b16 %v267
    %v339 = vunpack.c.l.b16 %v268
    %v340 = vunpack.c.l.b16 %v269
    %v341 = vunpack.c.l.b16 %v270
    %v342 = vunpack.c.l.b16 %v271
    %v343 = vunpack.c.l.b16 %v272
    %v344 = vunpack.c.l.b16 %v273
    %v345 = vunpack.c.l.b16 %v274
    %v346 = vunpack.c.l.b16 %v275
    %v347 = vunpack.c.l.b16 %v276
    %v348 = vunpack.c.l.b16 %v277
    %v349 = vunpack.c.l.b16 %v278
    %v350 = vunpack.c.l.b16 %v279
    %v351 = vpack.c.b16 %v320, %v319
    %v352 = vpack.c.b16 %v322, %v321
    %v353 = vpack.c.b16 %v324, %v323
    %v354 = vpack.c.b16 %v326, %v325
    %v355 = vpack.c.b16 %v328, %v327
    %v356 = vpack.c.b16 %v330, %v329
    %v357 = vpack.c.b16 %v332, %v331
    %v358 = vpack.c.b16 %v334, %v333
    %v359 = vpack.c.b16 %v336, %v335
    %v360 = vpack.c.b16 %v338, %v337
    %v361 = vpack.c.b16 %v340, %v339
    %v362 = vpack.c.b16 %v342, %v341
    %v363 = vpack.c.b16 %v344, %v343
    %v364 = vpack.c.b16 %v346, %v345
    %v365 = vpack.c.b16 %v348, %v347
    %v366 = vpack.c.b16 %v350, %v349
    %383 = vmatprep.subr.bf16.mxu0 0
    %384 = vmatpush1.bf16.msra.mxu0 %v351
    %385 = vmatprep.subr.bf16.mxu0 0
    %386 = vmatpush1.bf16.msra.mxu0 %v352
    %387 = vmatprep.subr.bf16.mxu0 0
    %388 = vmatpush1.bf16.msra.mxu0 %v353
    %389 = vmatprep.subr.bf16.mxu0 0
    %390 = vmatpush1.bf16.msra.mxu0 %v354
    %391 = vmatprep.subr.bf16.mxu0 0
    %392 = vmatpush1.bf16.msra.mxu0 %v355
    %393 = vmatprep.subr.bf16.mxu0 0
    %394 = vmatpush1.bf16.msra.mxu0 %v356
    %395 = vmatprep.subr.bf16.mxu0 0
    %396 = vmatpush1.bf16.msra.mxu0 %v357
    %397 = vmatprep.subr.bf16.mxu0 0
    %398 = vmatpush1.bf16.msra.mxu0 %v358
    %399 = vmatprep.subr.bf16.mxu0 0
    %400 = vmatpush1.bf16.msra.mxu0 %v359
    %401 = vmatprep.subr.bf16.mxu0 0
    %402 = vmatpush1.bf16.msra.mxu0 %v360
    %403 = vmatprep.subr.bf16.mxu0 0
    %404 = vmatpush1.bf16.msra.mxu0 %v361
    %405 = vmatprep.subr.bf16.mxu0 0
    %406 = vmatpush1.bf16.msra.mxu0 %v362
    %407 = vmatprep.subr.bf16.mxu0 0
    %408 = vmatpush1.bf16.msra.mxu0 %v363
    %409 = vmatprep.subr.bf16.mxu0 0
    %410 = vmatpush1.bf16.msra.mxu0 %v364
    %411 = vmatprep.subr.bf16.mxu0 0
    %412 = vmatpush1.bf16.msra.mxu0 %v365
    %413 = vmatprep.subr.bf16.mxu0 0
    %414 = vmatpush1.bf16.msra.mxu0 %v366
    %415 = vmatprep.mubr.bf16.mxu0 %v247
    %416 = vmatmul.mubr.bf16.gmra.mrb[0].mxu0 %v246
    %v417 = vpop.f32.mrb[0].mxu0
    %v418 = vadd.f32 %v285, %v417
    %v419 = vpop.f32.mrb[0].mxu0
    %v420 = vpop.f32.mrb[0].mxu0
    %v421 = vpop.f32.mrb[0].mxu0
    %422 = vdwg.mxu0
    %v423 = vld [vmem:[%s1] sm:$0xff]
    %v424 = vpack.c.bf16 %v423, %v423
    %v426 = vsel %vm199, %v424, 0
    %428 = vmatprep.subr.bf16.mxu0 %v196
    %429 = vmatpush1.bf16.msra.mxu0 %v195
    %430 = vmatprep.subr.bf16.mxu0 0
    %431 = vmatpush1.bf16.msra.mxu0 0
    %432 = vmatprep.subr.bf16.mxu0 0
    %433 = vmatpush1.bf16.msra.mxu0 0
    %434 = vmatprep.subr.bf16.mxu0 0
    %435 = vmatpush1.bf16.msra.mxu0 0
    %436 = vmatprep.subr.bf16.mxu0 0
    %437 = vmatpush1.bf16.msra.mxu0 0
    %438 = vmatprep.subr.bf16.mxu0 0
    %439 = vmatpush1.bf16.msra.mxu0 0
    %440 = vmatprep.subr.bf16.mxu0 0
    %441 = vmatpush1.bf16.msra.mxu0 0
    %442 = vmatprep.subr.bf16.mxu0 0
    %443 = vmatpush1.bf16.msra.mxu0 0
    %444 = vmatprep.subr.bf16.mxu0 0
    %445 = vmatpush1.bf16.msra.mxu0 0
    %446 = vmatprep.subr.bf16.mxu0 0
    %447 = vmatpush1.bf16.msra.mxu0 0
    %448 = vmatprep.subr.bf16.mxu0 0
    %449 = vmatpush1.bf16.msra.mxu0 0
    %450 = vmatprep.subr.bf16.mxu0 0
    %451 = vmatpush1.bf16.msra.mxu0 0
    %452 = vmatprep.subr.bf16.mxu0 0
    %453 = vmatpush1.bf16.msra.mxu0 0
    %454 = vmatprep.subr.bf16.mxu0 0
    %455 = vmatpush1.bf16.msra.mxu0 0
    %456 = vmatprep.subr.bf16.mxu0 0
    %457 = vmatpush1.bf16.msra.mxu0 0
    %458 = vmatprep.subr.bf16.mxu0 0
    %459 = vmatpush1.bf16.msra.mxu0 0
    %460 = vmatprep.mubr.bf16.mxu0 0
    %461 = vmatmul.mubr.bf16.gmra.mrb[0].mxu0 %v426
    %v462 = vpop.f32.mrb[0].mxu0
    %v463 = vadd.f32 %v182, %v462
    %v464 = vpop.f32.mrb[0].mxu0
    %v465 = vadd.f32 %v186, %v464
    %v466 = vpop.f32.mrb[0].mxu0
    %v467 = vpop.f32.mrb[0].mxu0
    %468 = vdwg.mxu0
    %v469 = vmax.f32 %v463, 0.0
    %v470 = vmax.f32 %v465, 0.0
    %v471 = vpack.c.bf16 %v469, %v469
    %v472 = vpack.c.bf16 %v470, %v470
    %473 = vmatprep.subr.bf16.mxu0 0
    %474 = vmatpush1.bf16.msra.mxu0 %v351
    %475 = vmatprep.subr.bf16.mxu0 0
    %476 = vmatpush1.bf16.msra.mxu0 %v352
    %477 = vmatprep.subr.bf16.mxu0 0
    %478 = vmatpush1.bf16.msra.mxu0 %v353
    %479 = vmatprep.subr.bf16.mxu0 0
    %480 = vmatpush1.bf16.msra.mxu0 %v354
    %481 = vmatprep.subr.bf16.mxu0 0
    %482 = vmatpush1.bf16.msra.mxu0 %v355
    %483 = vmatprep.subr.bf16.mxu0 0
    %484 = vmatpush1.bf16.msra.mxu0 %v356
    %485 = vmatprep.subr.bf16.mxu0 0
    %486 = vmatpush1.bf16.msra.mxu0 %v357
    %487 = vmatprep.subr.bf16.mxu0 0
    %488 = vmatpush1.bf16.msra.mxu0 %v358
    %489 = vmatprep.subr.bf16.mxu0 0
    %490 = vmatpush1.bf16.msra.mxu0 %v359
    %491 = vmatprep.subr.bf16.mxu0 0
    %492 = vmatpush1.bf16.msra.mxu0 %v360
    %493 = vmatprep.subr.bf16.mxu0 0
    %494 = vmatpush1.bf16.msra.mxu0 %v361
    %495 = vmatprep.subr.bf16.mxu0 0
    %496 = vmatpush1.bf16.msra.mxu0 %v362
    %497 = vmatprep.subr.bf16.mxu0 0
    %498 = vmatpush1.bf16.msra.mxu0 %v363
    %499 = vmatprep.subr.bf16.mxu0 0
    %500 = vmatpush1.bf16.msra.mxu0 %v364
    %501 = vmatprep.subr.bf16.mxu0 0
    %502 = vmatpush1.bf16.msra.mxu0 %v365
    %503 = vmatprep.subr.bf16.mxu0 0
    %504 = vmatpush1.bf16.msra.mxu0 %v366
    %505 = vmatprep.mubr.bf16.mxu0 %v472
    %506 = vmatmul.mubr.bf16.gmra.mrb[0].mxu0 %v471
    %v507 = vpop.f32.mrb[0].mxu0
    %v508 = vadd.f32 %v285, %v507
    %v509 = vpop.f32.mrb[0].mxu0
    %v510 = vpop.f32.mrb[0].mxu0
    %v511 = vpop.f32.mrb[0].mxu0
    %512 = vdwg.mxu0
    %513 = vst [vmem:[#allocation18] sm:$0xff] %v508
    %v514 = vpack.c.bf16 %v418, %v418
    %v515 = vld [vmem:[#allocation7] sm:$0xff]
    %v516 = vld [vmem:[#allocation7 + $0x8] sm:$0xff]
    %v517 = vld [vmem:[#allocation7 + $0x10] sm:$0xff]
    %v518 = vld [vmem:[#allocation7 + $0x18] sm:$0xff]
    %v519 = vld [vmem:[#allocation7 + $0x20] sm:$0xff]
    %v520 = vld [vmem:[#allocation7 + $0x28] sm:$0xff]
    %v521 = vld [vmem:[#allocation7 + $0x30] sm:$0xff]
    %v522 = vld [vmem:[#allocation7 + $0x38] sm:$0xff]
    %v523 = vld [vmem:[#allocation7 + $0x40] sm:$0xff]
    %v524 = vld [vmem:[#allocation7 + $0x48] sm:$0xff]
    %v525 = vld [vmem:[#allocation7 + $0x50] sm:$0xff]
    %v526 = vld [vmem:[#allocation7 + $0x58] sm:$0xff]
    %v527 = vld [vmem:[#allocation7 + $0x60] sm:$0xff]
    %v528 = vld [vmem:[#allocation7 + $0x68] sm:$0xff]
    %v529 = vld [vmem:[#allocation7 + $0x70] sm:$0xff]
    %v530 = vld [vmem:[#allocation7 + $0x78] sm:$0xff]
    %v531 = vld [vmem:[#allocation7 + $0x80] sm:$0xff]
    %v532 = vld [vmem:[#allocation7 + $0x88] sm:$0xff]
    %v533 = vld [vmem:[#allocation7 + $0x90] sm:$0xff]
    %v534 = vld [vmem:[#allocation7 + $0x98] sm:$0xff]
    %v535 = vld [vmem:[#allocation7 + $0xa0] sm:$0xff]
    %v536 = vld [vmem:[#allocation7 + $0xa8] sm:$0xff]
    %v537 = vld [vmem:[#allocation7 + $0xb0] sm:$0xff]
    %v538 = vld [vmem:[#allocation7 + $0xb8] sm:$0xff]
    %v539 = vld [vmem:[#allocation7 + $0xc0] sm:$0xff]
    %v540 = vld [vmem:[#allocation7 + $0xc8] sm:$0xff]
    %v541 = vld [vmem:[#allocation7 + $0xd0] sm:$0xff]
    %v542 = vld [vmem:[#allocation7 + $0xd8] sm:$0xff]
    %v543 = vld [vmem:[#allocation7 + $0xe0] sm:$0xff]
    %v544 = vld [vmem:[#allocation7 + $0xe8] sm:$0xff]
    %v545 = vld [vmem:[#allocation7 + $0xf0] sm:$0xff]
    %v546 = vld [vmem:[#allocation7 + $0xf8] sm:$0xff]
    %v579 = vunpack.c.l.b16 %v515
    %v580 = vunpack.c.h.b16 %v515
    %v581 = vunpack.c.l.b16 %v516
    %v582 = vunpack.c.h.b16 %v516
    %v583 = vunpack.c.l.b16 %v517
    %v584 = vunpack.c.h.b16 %v517
    %v585 = vunpack.c.l.b16 %v518
    %v586 = vunpack.c.h.b16 %v518
    %v587 = vunpack.c.l.b16 %v519
    %v588 = vunpack.c.h.b16 %v519
    %v589 = vunpack.c.l.b16 %v520
    %v590 = vunpack.c.h.b16 %v520
    %v591 = vunpack.c.l.b16 %v521
    %v592 = vunpack.c.h.b16 %v521
    %v593 = vunpack.c.l.b16 %v522
    %v594 = vunpack.c.h.b16 %v522
    %v595 = vunpack.c.l.b16 %v523
    %v596 = vunpack.c.h.b16 %v523
    %v597 = vunpack.c.l.b16 %v524
    %v598 = vunpack.c.h.b16 %v524
    %v599 = vunpack.c.l.b16 %v525
    %v600 = vunpack.c.h.b16 %v525
    %v601 = vunpack.c.l.b16 %v526
    %v602 = vunpack.c.h.b16 %v526
    %v603 = vunpack.c.l.b16 %v527
    %v604 = vunpack.c.h.b16 %v527
    %v605 = vunpack.c.l.b16 %v528
    %v606 = vunpack.c.h.b16 %v528
    %v607 = vunpack.c.l.b16 %v529
    %v608 = vunpack.c.h.b16 %v529
    %v609 = vunpack.c.l.b16 %v530
    %v610 = vunpack.c.h.b16 %v530
    %v611 = vunpack.c.l.b16 %v531
    %v612 = vunpack.c.h.b16 %v531
    %v613 = vunpack.c.l.b16 %v532
    %v614 = vunpack.c.h.b16 %v532
    %v615 = vunpack.c.l.b16 %v533
    %v616 = vunpack.c.h.b16 %v533
    %v617 = vunpack.c.l.b16 %v534
    %v618 = vunpack.c.h.b16 %v534
    %v619 = vunpack.c.l.b16 %v535
    %v620 = vunpack.c.h.b16 %v535
    %v621 = vunpack.c.l.b16 %v536
    %v622 = vunpack.c.h.b16 %v536
    %v623 = vunpack.c.l.b16 %v537
    %v624 = vunpack.c.h.b16 %v537
    %v625 = vunpack.c.l.b16 %v538
    %v626 = vunpack.c.h.b16 %v538
    %v627 = vunpack.c.l.b16 %v539
    %v628 = vunpack.c.h.b16 %v539
    %v629 = vunpack.c.l.b16 %v540
    %v630 = vunpack.c.h.b16 %v540
    %v631 = vunpack.c.l.b16 %v541
    %v632 = vunpack.c.h.b16 %v541
    %v633 = vunpack.c.l.b16 %v542
    %v634 = vunpack.c.h.b16 %v542
    %v635 = vunpack.c.l.b16 %v543
    %v636 = vunpack.c.h.b16 %v543
    %v637 = vunpack.c.l.b16 %v544
    %v638 = vunpack.c.h.b16 %v544
    %v639 = vunpack.c.l.b16 %v545
    %v640 = vunpack.c.h.b16 %v545
    %v641 = vunpack.c.l.b16 %v546
    %v642 = vunpack.c.h.b16 %v546
    %v643 = vpack.c.b16 %v583, %v579
    %v644 = vpack.c.b16 %v584, %v580
    %v645 = vpack.c.b16 %v585, %v581
    %v646 = vpack.c.b16 %v586, %v582
    %v647 = vpack.c.b16 %v591, %v587
    %v648 = vpack.c.b16 %v592, %v588
    %v649 = vpack.c.b16 %v593, %v589
    %v650 = vpack.c.b16 %v594, %v590
    %v651 = vpack.c.b16 %v599, %v595
    %v652 = vpack.c.b16 %v600, %v596
    %v653 = vpack.c.b16 %v601, %v597
    %v654 = vpack.c.b16 %v602, %v598
    %v655 = vpack.c.b16 %v607, %v603
    %v656 = vpack.c.b16 %v608, %v604
    %v657 = vpack.c.b16 %v609, %v605
    %v658 = vpack.c.b16 %v610, %v606
    %v659 = vpack.c.b16 %v615, %v611
    %v660 = vpack.c.b16 %v616, %v612
    %v661 = vpack.c.b16 %v617, %v613
    %v662 = vpack.c.b16 %v618, %v614
    %v663 = vpack.c.b16 %v623, %v619
    %v664 = vpack.c.b16 %v624, %v620
    %v665 = vpack.c.b16 %v625, %v621
    %v666 = vpack.c.b16 %v626, %v622
    %v667 = vpack.c.b16 %v631, %v627
    %v668 = vpack.c.b16 %v632, %v628
    %v669 = vpack.c.b16 %v633, %v629
    %v670 = vpack.c.b16 %v634, %v630
    %v671 = vpack.c.b16 %v639, %v635
    %v672 = vpack.c.b16 %v640, %v636
    %v673 = vpack.c.b16 %v641, %v637
    %v674 = vpack.c.b16 %v642, %v638
    %707 = vmatprep.subr.bf16.mxu0 %v644
    %708 = vmatpush1.bf16.msra.mxu0 %v643
    %709 = vmatprep.subr.bf16.mxu0 %v648
    %710 = vmatpush1.bf16.msra.mxu0 %v647
    %711 = vmatprep.subr.bf16.mxu0 %v652
    %712 = vmatpush1.bf16.msra.mxu0 %v651
    %713 = vmatprep.subr.bf16.mxu0 %v656
    %714 = vmatpush1.bf16.msra.mxu0 %v655
    %715 = vmatprep.subr.bf16.mxu0 %v660
    %716 = vmatpush1.bf16.msra.mxu0 %v659
    %717 = vmatprep.subr.bf16.mxu0 %v664
    %718 = vmatpush1.bf16.msra.mxu0 %v663
    %719 = vmatprep.subr.bf16.mxu0 %v668
    %720 = vmatpush1.bf16.msra.mxu0 %v667
    %721 = vmatprep.subr.bf16.mxu0 %v672
    %722 = vmatpush1.bf16.msra.mxu0 %v671
    %723 = vmatprep.subr.bf16.mxu0 0
    %724 = vmatpush1.bf16.msra.mxu0 0
    %725 = vmatprep.subr.bf16.mxu0 0
    %726 = vmatpush1.bf16.msra.mxu0 0
    %727 = vmatprep.subr.bf16.mxu0 0
    %728 = vmatpush1.bf16.msra.mxu0 0
    %729 = vmatprep.subr.bf16.mxu0 0
    %730 = vmatpush1.bf16.msra.mxu0 0
    %731 = vmatprep.subr.bf16.mxu0 0
    %732 = vmatpush1.bf16.msra.mxu0 0
    %733 = vmatprep.subr.bf16.mxu0 0
    %734 = vmatpush1.bf16.msra.mxu0 0
    %735 = vmatprep.subr.bf16.mxu0 0
    %736 = vmatpush1.bf16.msra.mxu0 0
    %737 = vmatprep.subr.bf16.mxu0 0
    %738 = vmatpush1.bf16.msra.mxu0 0
    %739 = vmatprep.mubr.bf16.mxu0 0
    %740 = vmatmul.mubr.bf16.gmra.mrb[0].mxu0 %v514
    %v741 = vpop.f32.mrb[0].mxu0
    %v742 = vadd.f32 0.0, %v741
    %v743 = vpop.f32.mrb[0].mxu0
    %v744 = vadd.f32 0.0, %v743
    %v745 = vpop.f32.mrb[0].mxu0
    %v746 = vpop.f32.mrb[0].mxu0
    %747 = vdwg.mxu0
    %748 = vmatprep.subr.bf16.mxu0 %v646
    %749 = vmatpush1.bf16.msra.mxu0 %v645
    %750 = vmatprep.subr.bf16.mxu0 %v650
    %751 = vmatpush1.bf16.msra.mxu0 %v649
    %752 = vmatprep.subr.bf16.mxu0 %v654
    %753 = vmatpush1.bf16.msra.mxu0 %v653
    %754 = vmatprep.subr.bf16.mxu0 %v658
    %755 = vmatpush1.bf16.msra.mxu0 %v657
    %756 = vmatprep.subr.bf16.mxu0 %v662
    %757 = vmatpush1.bf16.msra.mxu0 %v661
    %758 = vmatprep.subr.bf16.mxu0 %v666
    %759 = vmatpush1.bf16.msra.mxu0 %v665
    %760 = vmatprep.subr.bf16.mxu0 %v670
    %761 = vmatpush1.bf16.msra.mxu0 %v669
    %762 = vmatprep.subr.bf16.mxu0 %v674
    %763 = vmatpush1.bf16.msra.mxu0 %v673
    %764 = vmatprep.subr.bf16.mxu0 0
    %765 = vmatpush1.bf16.msra.mxu0 0
    %766 = vmatprep.subr.bf16.mxu0 0
    %767 = vmatpush1.bf16.msra.mxu0 0
    %768 = vmatprep.subr.bf16.mxu0 0
    %769 = vmatpush1.bf16.msra.mxu0 0
    %770 = vmatprep.subr.bf16.mxu0 0
    %771 = vmatpush1.bf16.msra.mxu0 0
    %772 = vmatprep.subr.bf16.mxu0 0
    %773 = vmatpush1.bf16.msra.mxu0 0
    %774 = vmatprep.subr.bf16.mxu0 0
    %775 = vmatpush1.bf16.msra.mxu0 0
    %776 = vmatprep.subr.bf16.mxu0 0
    %777 = vmatpush1.bf16.msra.mxu0 0
    %778 = vmatprep.subr.bf16.mxu0 0
    %779 = vmatpush1.bf16.msra.mxu0 0
    %780 = vmatprep.mubr.bf16.mxu0 0
    %781 = vmatmul.mubr.bf16.gmra.mrb[0].mxu0 %v514
    %v782 = vpop.f32.mrb[0].mxu0
    %v783 = vadd.f32 0.0, %v782
    %v784 = vpop.f32.mrb[0].mxu0
    %v785 = vadd.f32 0.0, %v784
    %v786 = vpop.f32.mrb[0].mxu0
    %v787 = vpop.f32.mrb[0].mxu0
    %788 = vdwg.mxu0
    %v789 = vpack.c.bf16 %v508, %v508
    %v790 = vld [vmem:[#allocation8] sm:$0xff]
    %v791 = vld [vmem:[#allocation8 + $0x8] sm:$0xff]
    %v792 = vld [vmem:[#allocation8 + $0x10] sm:$0xff]
    %v793 = vld [vmem:[#allocation8 + $0x18] sm:$0xff]
    %v794 = vld [vmem:[#allocation8 + $0x20] sm:$0xff]
    %v795 = vld [vmem:[#allocation8 + $0x28] sm:$0xff]
    %v796 = vld [vmem:[#allocation8 + $0x30] sm:$0xff]
    %v797 = vld [vmem:[#allocation8 + $0x38] sm:$0xff]
    %v798 = vld [vmem:[#allocation8 + $0x40] sm:$0xff]
    %v799 = vld [vmem:[#allocation8 + $0x48] sm:$0xff]
    %v800 = vld [vmem:[#allocation8 + $0x50] sm:$0xff]
    %v801 = vld [vmem:[#allocation8 + $0x58] sm:$0xff]
    %v802 = vld [vmem:[#allocation8 + $0x60] sm:$0xff]
    %v803 = vld [vmem:[#allocation8 + $0x68] sm:$0xff]
    %v804 = vld [vmem:[#allocation8 + $0x70] sm:$0xff]
    %v805 = vld [vmem:[#allocation8 + $0x78] sm:$0xff]
    %v822 = vunpack.c.l.b16 %v790
    %v823 = vunpack.c.h.b16 %v790
    %v824 = vunpack.c.l.b16 %v791
    %v825 = vunpack.c.h.b16 %v791
    %v826 = vunpack.c.l.b16 %v792
    %v827 = vunpack.c.h.b16 %v792
    %v828 = vunpack.c.l.b16 %v793
    %v829 = vunpack.c.h.b16 %v793
    %v830 = vunpack.c.l.b16 %v794
    %v831 = vunpack.c.h.b16 %v794
    %v832 = vunpack.c.l.b16 %v795
    %v833 = vunpack.c.h.b16 %v795
    %v834 = vunpack.c.l.b16 %v796
    %v835 = vunpack.c.h.b16 %v796
    %v836 = vunpack.c.l.b16 %v797
    %v837 = vunpack.c.h.b16 %v797
    %v838 = vunpack.c.l.b16 %v798
    %v839 = vunpack.c.h.b16 %v798
    %v840 = vunpack.c.l.b16 %v799
    %v841 = vunpack.c.h.b16 %v799
    %v842 = vunpack.c.l.b16 %v800
    %v843 = vunpack.c.h.b16 %v800
    %v844 = vunpack.c.l.b16 %v801
    %v845 = vunpack.c.h.b16 %v801
    %v846 = vunpack.c.l.b16 %v802
    %v847 = vunpack.c.h.b16 %v802
    %v848 = vunpack.c.l.b16 %v803
    %v849 = vunpack.c.h.b16 %v803
    %v850 = vunpack.c.l.b16 %v804
    %v851 = vunpack.c.h.b16 %v804
    %v852 = vunpack.c.l.b16 %v805
    %v853 = vunpack.c.h.b16 %v805
    %v854 = vpack.c.b16 %v824, %v822
    %v855 = vpack.c.b16 %v825, %v823
    %v856 = vpack.c.b16 %v828, %v826
    %v857 = vpack.c.b16 %v829, %v827
    %v858 = vpack.c.b16 %v832, %v830
    %v859 = vpack.c.b16 %v833, %v831
    %v860 = vpack.c.b16 %v836, %v834
    %v861 = vpack.c.b16 %v837, %v835
    %v862 = vpack.c.b16 %v840, %v838
    %v863 = vpack.c.b16 %v841, %v839
    %v864 = vpack.c.b16 %v844, %v842
    %v865 = vpack.c.b16 %v845, %v843
    %v866 = vpack.c.b16 %v848, %v846
    %v867 = vpack.c.b16 %v849, %v847
    %v868 = vpack.c.b16 %v852, %v850
    %v869 = vpack.c.b16 %v853, %v851
    %886 = vmatprep.subr.bf16.mxu0 %v855
    %887 = vmatpush1.bf16.msra.mxu0 %v854
    %888 = vmatprep.subr.bf16.mxu0 %v857
    %889 = vmatpush1.bf16.msra.mxu0 %v856
    %890 = vmatprep.subr.bf16.mxu0 %v859
    %891 = vmatpush1.bf16.msra.mxu0 %v858
    %892 = vmatprep.subr.bf16.mxu0 %v861
    %893 = vmatpush1.bf16.msra.mxu0 %v860
    %894 = vmatprep.subr.bf16.mxu0 %v863
    %895 = vmatpush1.bf16.msra.mxu0 %v862
    %896 = vmatprep.subr.bf16.mxu0 %v865
    %897 = vmatpush1.bf16.msra.mxu0 %v864
    %898 = vmatprep.subr.bf16.mxu0 %v867
    %899 = vmatpush1.bf16.msra.mxu0 %v866
    %900 = vmatprep.subr.bf16.mxu0 %v869
    %901 = vmatpush1.bf16.msra.mxu0 %v868
    %902 = vmatprep.subr.bf16.mxu0 0
    %903 = vmatpush1.bf16.msra.mxu0 0
    %904 = vmatprep.subr.bf16.mxu0 0
    %905 = vmatpush1.bf16.msra.mxu0 0
    %906 = vmatprep.subr.bf16.mxu0 0
    %907 = vmatpush1.bf16.msra.mxu0 0
    %908 = vmatprep.subr.bf16.mxu0 0
    %909 = vmatpush1.bf16.msra.mxu0 0
    %910 = vmatprep.subr.bf16.mxu0 0
    %911 = vmatpush1.bf16.msra.mxu0 0
    %912 = vmatprep.subr.bf16.mxu0 0
    %913 = vmatpush1.bf16.msra.mxu0 0
    %914 = vmatprep.subr.bf16.mxu0 0
    %915 = vmatpush1.bf16.msra.mxu0 0
    %916 = vmatprep.subr.bf16.mxu0 0
    %917 = vmatpush1.bf16.msra.mxu0 0
    %918 = vmatprep.mubr.bf16.mxu0 0
    %919 = vmatmul.mubr.bf16.gmra.mrb[0].mxu0 %v789
    %v920 = vpop.f32.mrb[0].mxu0
    %v921 = vadd.f32 0.0, %v920
    %v922 = vpop.f32.mrb[0].mxu0
    %v923 = vadd.f32 0.0, %v922
    %v924 = vpop.f32.mrb[0].mxu0
    %v925 = vpop.f32.mrb[0].mxu0
    %926 = vdwg.mxu0
    %v927 = vadd.f32 %v742, %v921
    %v928 = vadd.f32 %v744, %v923
    %v929 = vld [vmem:[%s9] sm:$0x3]
    %v931 = vlaneseq
    %v932 = vshrl.u32 %v931, 7
    %v933 = vsub.s32 0, %v932
    %v934 = vrot.slane %v929, %v933
    %v935 = vlaneseq
    %v936 = vshrl.u32 %v935, 7
    %v937 = vsub.s32 1, %v936
    %v938 = vrot.slane %v929, %v937
    %v941 = vadd.f32 %v927, %v934
    %v942 = vadd.f32 %v928, %v938
    %v943 = vmax.f32 %v941, 0.0
    %v944 = vmax.f32 %v942, 0.0
    %v945 = vpack.c.bf16 %v943, %v943
    %v946 = vpack.c.bf16 %v944, %v944
    %v947 = vld [vmem:[#allocation10] sm:$0xf]
    %v948 = vld [vmem:[#allocation10 + $0x4] sm:$0xf]
    %v949 = vld [vmem:[#allocation10 + $0x8] sm:$0xf]
    %v950 = vld [vmem:[#allocation10 + $0xc] sm:$0xf]
    %v951 = vld [vmem:[#allocation10 + $0x10] sm:$0xf]
    %v952 = vld [vmem:[#allocation10 + $0x14] sm:$0xf]
    %v953 = vld [vmem:[#allocation10 + $0x18] sm:$0xf]
    %v954 = vld [vmem:[#allocation10 + $0x1c] sm:$0xf]
    %v955 = vld [vmem:[#allocation10 + $0x20] sm:$0xf]
    %v956 = vld [vmem:[#allocation10 + $0x24] sm:$0xf]
    %v957 = vld [vmem:[#allocation10 + $0x28] sm:$0xf]
    %v958 = vld [vmem:[#allocation10 + $0x2c] sm:$0xf]
    %v959 = vld [vmem:[#allocation10 + $0x30] sm:$0xf]
    %v960 = vld [vmem:[#allocation10 + $0x34] sm:$0xf]
    %v961 = vld [vmem:[#allocation10 + $0x38] sm:$0xf]
    %v962 = vld [vmem:[#allocation10 + $0x3c] sm:$0xf]
    %v963 = vld [vmem:[#allocation10 + $0x40] sm:$0xf]
    %v964 = vld [vmem:[#allocation10 + $0x44] sm:$0xf]
    %v965 = vld [vmem:[#allocation10 + $0x48] sm:$0xf]
    %v966 = vld [vmem:[#allocation10 + $0x4c] sm:$0xf]
    %v967 = vld [vmem:[#allocation10 + $0x50] sm:$0xf]
    %v968 = vld [vmem:[#allocation10 + $0x54] sm:$0xf]
    %v969 = vld [vmem:[#allocation10 + $0x58] sm:$0xf]
    %v970 = vld [vmem:[#allocation10 + $0x5c] sm:$0xf]
    %v971 = vld [vmem:[#allocation10 + $0x60] sm:$0xf]
    %v972 = vld [vmem:[#allocation10 + $0x64] sm:$0xf]
    %v973 = vld [vmem:[#allocation10 + $0x68] sm:$0xf]
    %v974 = vld [vmem:[#allocation10 + $0x6c] sm:$0xf]
    %v975 = vld [vmem:[#allocation10 + $0x70] sm:$0xf]
    %v976 = vld [vmem:[#allocation10 + $0x74] sm:$0xf]
    %v977 = vld [vmem:[#allocation10 + $0x78] sm:$0xf]
    %v978 = vld [vmem:[#allocation10 + $0x7c] sm:$0xf]
    %v979 = vld [vmem:[%s11] sm:$0x1]
    %v981 = vlaneseq
    %v982 = vshrl.u32 %v981, 7
    %v983 = vsub.s32 0, %v982
    %v984 = vrot.slane %v979, %v983
    %v1018 = vunpack.c.l.b16 %v947
    %v1019 = vunpack.c.l.b16 %v948
    %v1020 = vunpack.c.l.b16 %v949
    %v1021 = vunpack.c.l.b16 %v950
    %v1022 = vunpack.c.l.b16 %v951
    %v1023 = vunpack.c.l.b16 %v952
    %v1024 = vunpack.c.l.b16 %v953
    %v1025 = vunpack.c.l.b16 %v954
    %v1026 = vunpack.c.l.b16 %v955
    %v1027 = vunpack.c.l.b16 %v956
    %v1028 = vunpack.c.l.b16 %v957
    %v1029 = vunpack.c.l.b16 %v958
    %v1030 = vunpack.c.l.b16 %v959
    %v1031 = vunpack.c.l.b16 %v960
    %v1032 = vunpack.c.l.b16 %v961
    %v1033 = vunpack.c.l.b16 %v962
    %v1034 = vunpack.c.l.b16 %v963
    %v1035 = vunpack.c.l.b16 %v964
    %v1036 = vunpack.c.l.b16 %v965
    %v1037 = vunpack.c.l.b16 %v966
    %v1038 = vunpack.c.l.b16 %v967
    %v1039 = vunpack.c.l.b16 %v968
    %v1040 = vunpack.c.l.b16 %v969
    %v1041 = vunpack.c.l.b16 %v970
    %v1042 = vunpack.c.l.b16 %v971
    %v1043 = vunpack.c.l.b16 %v972
    %v1044 = vunpack.c.l.b16 %v973
    %v1045 = vunpack.c.l.b16 %v974
    %v1046 = vunpack.c.l.b16 %v975
    %v1047 = vunpack.c.l.b16 %v976
    %v1048 = vunpack.c.l.b16 %v977
    %v1049 = vunpack.c.l.b16 %v978
    %v1050 = vpack.c.b16 %v1019, %v1018
    %v1051 = vpack.c.b16 %v1021, %v1020
    %v1052 = vpack.c.b16 %v1023, %v1022
    %v1053 = vpack.c.b16 %v1025, %v1024
    %v1054 = vpack.c.b16 %v1027, %v1026
    %v1055 = vpack.c.b16 %v1029, %v1028
    %v1056 = vpack.c.b16 %v1031, %v1030
    %v1057 = vpack.c.b16 %v1033, %v1032
    %v1058 = vpack.c.b16 %v1035, %v1034
    %v1059 = vpack.c.b16 %v1037, %v1036
    %v1060 = vpack.c.b16 %v1039, %v1038
    %v1061 = vpack.c.b16 %v1041, %v1040
    %v1062 = vpack.c.b16 %v1043, %v1042
    %v1063 = vpack.c.b16 %v1045, %v1044
    %v1064 = vpack.c.b16 %v1047, %v1046
    %v1065 = vpack.c.b16 %v1049, %v1048
    %1082 = vmatprep.subr.bf16.mxu0 0
    %1083 = vmatpush1.bf16.msra.mxu0 %v1050
    %1084 = vmatprep.subr.bf16.mxu0 0
    %1085 = vmatpush1.bf16.msra.mxu0 %v1051
    %1086 = vmatprep.subr.bf16.mxu0 0
    %1087 = vmatpush1.bf16.msra.mxu0 %v1052
    %1088 = vmatprep.subr.bf16.mxu0 0
    %1089 = vmatpush1.bf16.msra.mxu0 %v1053
    %1090 = vmatprep.subr.bf16.mxu0 0
    %1091 = vmatpush1.bf16.msra.mxu0 %v1054
    %1092 = vmatprep.subr.bf16.mxu0 0
    %1093 = vmatpush1.bf16.msra.mxu0 %v1055
    %1094 = vmatprep.subr.bf16.mxu0 0
    %1095 = vmatpush1.bf16.msra.mxu0 %v1056
    %1096 = vmatprep.subr.bf16.mxu0 0
    %1097 = vmatpush1.bf16.msra.mxu0 %v1057
    %1098 = vmatprep.subr.bf16.mxu0 0
    %1099 = vmatpush1.bf16.msra.mxu0 %v1058
    %1100 = vmatprep.subr.bf16.mxu0 0
    %1101 = vmatpush1.bf16.msra.mxu0 %v1059
    %1102 = vmatprep.subr.bf16.mxu0 0
    %1103 = vmatpush1.bf16.msra.mxu0 %v1060
    %1104 = vmatprep.subr.bf16.mxu0 0
    %1105 = vmatpush1.bf16.msra.mxu0 %v1061
    %1106 = vmatprep.subr.bf16.mxu0 0
    %1107 = vmatpush1.bf16.msra.mxu0 %v1062
    %1108 = vmatprep.subr.bf16.mxu0 0
    %1109 = vmatpush1.bf16.msra.mxu0 %v1063
    %1110 = vmatprep.subr.bf16.mxu0 0
    %1111 = vmatpush1.bf16.msra.mxu0 %v1064
    %1112 = vmatprep.subr.bf16.mxu0 0
    %1113 = vmatpush1.bf16.msra.mxu0 %v1065
    %1114 = vmatprep.mubr.bf16.mxu0 %v946
    %1115 = vmatmul.mubr.bf16.gmra.mrb[0].mxu0 %v945
    %v1116 = vpop.f32.mrb[0].mxu0
    %v1117 = vadd.f32 %v984, %v1116
    %v1118 = vpop.f32.mrb[0].mxu0
    %v1119 = vpop.f32.mrb[0].mxu0
    %v1120 = vpop.f32.mrb[0].mxu0
    %1121 = vdwg.mxu0
    %1122 = vst [vmem:[%s16] sm:$0xff] %v1117
    %v1123 = vld [vmem:[%s2] sm:$0xff]
    %v1124 = vpack.c.bf16 %v1123, %v1123
    %v1125 = vld [vmem:[#allocation11] sm:$0xf]
    %v1128 = vunpack.c.l.s4 1983009808
    %v1129 = vunpack.c.0.s8 %v1128
    %v1130 = vlaneseq
    %v1131 = vshrl.u32 %v1130, 7
    %v1132 = vsub.s32 %v1129, %v1131
    %v1133 = vrot.slane %v1125, %v1132
    %v1134 = vcombine.high %v1133, %v1133
    %vm1135 = vcmask 31744
    %v1137 = vsel %vm1135, %v1124, 0
    %vm1139 = vcmask 1041408
    %v1141 = vsel %vm1139, %v1133, 0
    %v1144 = vsel %vm1139, %v1134, 0
    %1146 = vmatprep.subr.bf16.mxu0 %v1144
    %1147 = vmatpush1.bf16.msra.mxu0 %v1141
    %1148 = vmatprep.subr.bf16.mxu0 0
    %1149 = vmatpush1.bf16.msra.mxu0 0
    %1150 = vmatprep.subr.bf16.mxu0 0
    %1151 = vmatpush1.bf16.msra.mxu0 0
    %1152 = vmatprep.subr.bf16.mxu0 0
    %1153 = vmatpush1.bf16.msra.mxu0 0
    %1154 = vmatprep.subr.bf16.mxu0 0
    %1155 = vmatpush1.bf16.msra.mxu0 0
    %1156 = vmatprep.subr.bf16.mxu0 0
    %1157 = vmatpush1.bf16.msra.mxu0 0
    %1158 = vmatprep.subr.bf16.mxu0 0
    %1159 = vmatpush1.bf16.msra.mxu0 0
    %1160 = vmatprep.subr.bf16.mxu0 0
    %1161 = vmatpush1.bf16.msra.mxu0 0
    %1162 = vmatprep.subr.bf16.mxu0 0
    %1163 = vmatpush1.bf16.msra.mxu0 0
    %1164 = vmatprep.subr.bf16.mxu0 0
    %1165 = vmatpush1.bf16.msra.mxu0 0
    %1166 = vmatprep.subr.bf16.mxu0 0
    %1167 = vmatpush1.bf16.msra.mxu0 0
    %1168 = vmatprep.subr.bf16.mxu0 0
    %1169 = vmatpush1.bf16.msra.mxu0 0
    %1170 = vmatprep.subr.bf16.mxu0 0
    %1171 = vmatpush1.bf16.msra.mxu0 0
    %1172 = vmatprep.subr.bf16.mxu0 0
    %1173 = vmatpush1.bf16.msra.mxu0 0
    %1174 = vmatprep.subr.bf16.mxu0 0
    %1175 = vmatpush1.bf16.msra.mxu0 0
    %1176 = vmatprep.subr.bf16.mxu0 0
    %1177 = vmatpush1.bf16.msra.mxu0 0
    %1178 = vmatprep.mubr.bf16.mxu0 0
    %1179 = vmatmul.mubr.bf16.gmra.mrb[0].mxu0 %v1137
    %v1180 = vpop.f32.mrb[0].mxu0
    %v1181 = vadd.f32 0.0, %v1180
    %v1182 = vpop.f32.mrb[0].mxu0
    %v1183 = vadd.f32 0.0, %v1182
    %v1184 = vpop.f32.mrb[0].mxu0
    %v1185 = vpop.f32.mrb[0].mxu0
    %1186 = vdwg.mxu0
    %v1187 = vadd.f32 %v783, %v1181
    %v1188 = vadd.f32 %v785, %v1183
    %v1189 = vld [vmem:[#allocation13] sm:$0x3]
    %v1191 = vlaneseq
    %v1192 = vshrl.u32 %v1191, 7
    %v1193 = vsub.s32 0, %v1192
    %v1194 = vrot.slane %v1189, %v1193
    %v1195 = vlaneseq
    %v1196 = vshrl.u32 %v1195, 7
    %v1197 = vsub.s32 1, %v1196
    %v1198 = vrot.slane %v1189, %v1197
    %v1201 = vadd.f32 %v1187, %v1194
    %v1202 = vadd.f32 %v1188, %v1198
    %v1203 = vmax.f32 %v1201, 0.0
    %v1204 = vmax.f32 %v1202, 0.0
    %v1205 = vpack.c.bf16 %v1203, %v1203
    %v1206 = vpack.c.bf16 %v1204, %v1204
    %v1207 = vld [vmem:[#allocation14] sm:$0xf]
    %v1208 = vld [vmem:[#allocation14 + $0x4] sm:$0xf]
    %v1209 = vld [vmem:[#allocation14 + $0x8] sm:$0xf]
    %v1210 = vld [vmem:[#allocation14 + $0xc] sm:$0xf]
    %v1211 = vld [vmem:[#allocation14 + $0x10] sm:$0xf]
    %v1212 = vld [vmem:[#allocation14 + $0x14] sm:$0xf]
    %v1213 = vld [vmem:[#allocation14 + $0x18] sm:$0xf]
    %v1214 = vld [vmem:[#allocation14 + $0x1c] sm:$0xf]
    %v1215 = vld [vmem:[#allocation14 + $0x20] sm:$0xf]
    %v1216 = vld [vmem:[#allocation14 + $0x24] sm:$0xf]
    %v1217 = vld [vmem:[#allocation14 + $0x28] sm:$0xf]
    %v1218 = vld [vmem:[#allocation14 + $0x2c] sm:$0xf]
    %v1219 = vld [vmem:[#allocation14 + $0x30] sm:$0xf]
    %v1220 = vld [vmem:[#allocation14 + $0x34] sm:$0xf]
    %v1221 = vld [vmem:[#allocation14 + $0x38] sm:$0xf]
    %v1222 = vld [vmem:[#allocation14 + $0x3c] sm:$0xf]
    %v1223 = vld [vmem:[#allocation14 + $0x40] sm:$0xf]
    %v1224 = vld [vmem:[#allocation14 + $0x44] sm:$0xf]
    %v1225 = vld [vmem:[#allocation14 + $0x48] sm:$0xf]
    %v1226 = vld [vmem:[#allocation14 + $0x4c] sm:$0xf]
    %v1227 = vld [vmem:[#allocation14 + $0x50] sm:$0xf]
    %v1228 = vld [vmem:[#allocation14 + $0x54] sm:$0xf]
    %v1229 = vld [vmem:[#allocation14 + $0x58] sm:$0xf]
    %v1230 = vld [vmem:[#allocation14 + $0x5c] sm:$0xf]
    %v1231 = vld [vmem:[#allocation14 + $0x60] sm:$0xf]
    %v1232 = vld [vmem:[#allocation14 + $0x64] sm:$0xf]
    %v1233 = vld [vmem:[#allocation14 + $0x68] sm:$0xf]
    %v1234 = vld [vmem:[#allocation14 + $0x6c] sm:$0xf]
    %v1235 = vld [vmem:[#allocation14 + $0x70] sm:$0xf]
    %v1236 = vld [vmem:[#allocation14 + $0x74] sm:$0xf]
    %v1237 = vld [vmem:[#allocation14 + $0x78] sm:$0xf]
    %v1238 = vld [vmem:[#allocation14 + $0x7c] sm:$0xf]
    %v1239 = vld [vmem:[#allocation16] sm:$0x1]
    %v1241 = vlaneseq
    %v1242 = vshrl.u32 %v1241, 7
    %v1243 = vsub.s32 0, %v1242
    %v1244 = vrot.slane %v1239, %v1243
    %v1278 = vunpack.c.l.b16 %v1207
    %v1279 = vunpack.c.l.b16 %v1208
    %v1280 = vunpack.c.l.b16 %v1209
    %v1281 = vunpack.c.l.b16 %v1210
    %v1282 = vunpack.c.l.b16 %v1211
    %v1283 = vunpack.c.l.b16 %v1212
    %v1284 = vunpack.c.l.b16 %v1213
    %v1285 = vunpack.c.l.b16 %v1214
    %v1286 = vunpack.c.l.b16 %v1215
    %v1287 = vunpack.c.l.b16 %v1216
    %v1288 = vunpack.c.l.b16 %v1217
    %v1289 = vunpack.c.l.b16 %v1218
    %v1290 = vunpack.c.l.b16 %v1219
    %v1291 = vunpack.c.l.b16 %v1220
    %v1292 = vunpack.c.l.b16 %v1221
    %v1293 = vunpack.c.l.b16 %v1222
    %v1294 = vunpack.c.l.b16 %v1223
    %v1295 = vunpack.c.l.b16 %v1224
    %v1296 = vunpack.c.l.b16 %v1225
    %v1297 = vunpack.c.l.b16 %v1226
    %v1298 = vunpack.c.l.b16 %v1227
    %v1299 = vunpack.c.l.b16 %v1228
    %v1300 = vunpack.c.l.b16 %v1229
    %v1301 = vunpack.c.l.b16 %v1230
    %v1302 = vunpack.c.l.b16 %v1231
    %v1303 = vunpack.c.l.b16 %v1232
    %v1304 = vunpack.c.l.b16 %v1233
    %v1305 = vunpack.c.l.b16 %v1234
    %v1306 = vunpack.c.l.b16 %v1235
    %v1307 = vunpack.c.l.b16 %v1236
    %v1308 = vunpack.c.l.b16 %v1237
    %v1309 = vunpack.c.l.b16 %v1238
    %v1310 = vpack.c.b16 %v1279, %v1278
    %v1311 = vpack.c.b16 %v1281, %v1280
    %v1312 = vpack.c.b16 %v1283, %v1282
    %v1313 = vpack.c.b16 %v1285, %v1284
    %v1314 = vpack.c.b16 %v1287, %v1286
    %v1315 = vpack.c.b16 %v1289, %v1288
    %v1316 = vpack.c.b16 %v1291, %v1290
    %v1317 = vpack.c.b16 %v1293, %v1292
    %v1318 = vpack.c.b16 %v1295, %v1294
    %v1319 = vpack.c.b16 %v1297, %v1296
    %v1320 = vpack.c.b16 %v1299, %v1298
    %v1321 = vpack.c.b16 %v1301, %v1300
    %v1322 = vpack.c.b16 %v1303, %v1302
    %v1323 = vpack.c.b16 %v1305, %v1304
    %v1324 = vpack.c.b16 %v1307, %v1306
    %v1325 = vpack.c.b16 %v1309, %v1308
    %1342 = vmatprep.subr.bf16.mxu0 0
    %1343 = vmatpush1.bf16.msra.mxu0 %v1310
    %1344 = vmatprep.subr.bf16.mxu0 0
    %1345 = vmatpush1.bf16.msra.mxu0 %v1311
    %1346 = vmatprep.subr.bf16.mxu0 0
    %1347 = vmatpush1.bf16.msra.mxu0 %v1312
    %1348 = vmatprep.subr.bf16.mxu0 0
    %1349 = vmatpush1.bf16.msra.mxu0 %v1313
    %1350 = vmatprep.subr.bf16.mxu0 0
    %1351 = vmatpush1.bf16.msra.mxu0 %v1314
    %1352 = vmatprep.subr.bf16.mxu0 0
    %1353 = vmatpush1.bf16.msra.mxu0 %v1315
    %1354 = vmatprep.subr.bf16.mxu0 0
    %1355 = vmatpush1.bf16.msra.mxu0 %v1316
    %1356 = vmatprep.subr.bf16.mxu0 0
    %1357 = vmatpush1.bf16.msra.mxu0 %v1317
    %1358 = vmatprep.subr.bf16.mxu0 0
    %1359 = vmatpush1.bf16.msra.mxu0 %v1318
    %1360 = vmatprep.subr.bf16.mxu0 0
    %1361 = vmatpush1.bf16.msra.mxu0 %v1319
    %1362 = vmatprep.subr.bf16.mxu0 0
    %1363 = vmatpush1.bf16.msra.mxu0 %v1320
    %1364 = vmatprep.subr.bf16.mxu0 0
    %1365 = vmatpush1.bf16.msra.mxu0 %v1321
    %1366 = vmatprep.subr.bf16.mxu0 0
    %1367 = vmatpush1.bf16.msra.mxu0 %v1322
    %1368 = vmatprep.subr.bf16.mxu0 0
    %1369 = vmatpush1.bf16.msra.mxu0 %v1323
    %1370 = vmatprep.subr.bf16.mxu0 0
    %1371 = vmatpush1.bf16.msra.mxu0 %v1324
    %1372 = vmatprep.subr.bf16.mxu0 0
    %1373 = vmatpush1.bf16.msra.mxu0 %v1325
    %1374 = vmatprep.mubr.bf16.mxu0 %v1206
    %1375 = vmatmul.mubr.bf16.gmra.mrb[0].mxu0 %v1205
    %v1376 = vpop.f32.mrb[0].mxu0
    %v1377 = vadd.f32 %v1244, %v1376
    %v1378 = vpop.f32.mrb[0].mxu0
    %v1379 = vpop.f32.mrb[0].mxu0
    %v1380 = vpop.f32.mrb[0].mxu0
    %1381 = vdwg.mxu0
    %1382 = vst [vmem:[#allocation17] sm:$0xff] %v1377
    // Predicated region
    $region102: #{icm_forward.1} parent=1 // pred_check
      _
    $region103: #{icm_forward.1} parent=1 // pred_check_branch
      %1384 = sbr.rel (0) target = $region105
    $region104: #{icm_forward.1} parent=1 // pred_region
      _
    $region105: #{icm_forward.1} parent=1 // pred_fallthru
      _
    // Predicated region
    $region106: #{icm_forward.1} parent=1 // pred_check
      _
    $region107: #{icm_forward.1} parent=1 // pred_check_branch
      %1386 = sbr.rel (0) target = $region109
    $region108: #{icm_forward.1} parent=1 // pred_region
      %s1388 = ssub.s32 128, 128
      %1389 = vsyncadd [#allocation4], %s1388
      %s1391 = sshll.u32 [#allocation17], 4
      %s1392 = int_to_ptr.vmem [resolvable:$true] %s1391
      %1394 = dma.vmem_to_hbm [thread:$0]  %s1392, 128, %s17, [#allocation4]
    $region109: #{icm_forward.1} parent=1 // pred_fallthru
      _
    // Predicated region
    $region110: #{icm_forward.1} parent=1 // pred_check
      _
    $region111: #{icm_forward.1} parent=1 // pred_check_branch
      %1396 = sbr.rel (0) target = $region113
    $region112: #{icm_forward.1} parent=1 // pred_region
      %s1398 = ssub.s32 128, 128
      %1399 = vsyncadd [#allocation19], %s1398
      %s1401 = sshll.u32 [#allocation18], 4
      %s1402 = int_to_ptr.vmem [resolvable:$true] %s1401
      %1404 = dma.vmem_to_hbm [thread:$0]  %s1402, 128, %s18, [#allocation19]
    $region113: #{icm_forward.1} parent=1 // pred_fallthru
      _
    // Predicated region
    $region114: #{icm_forward.1} parent=1 // pred_check
      _
    $region115: #{icm_forward.1} parent=1 // pred_check_branch
      %1406 = sbr.rel (0) target = $region117
    $region116: #{icm_forward.1} parent=1 // pred_region
      _
    $region117: #{icm_forward.1} parent=1 // pred_fallthru
      _
    // Predicated region
    $region118: #{icm_forward.1} parent=1 // pred_check
      _
    $region119: #{icm_forward.1} parent=1 // pred_check_branch
      %1408 = sbr.rel (0) target = $region121
    $region120: #{icm_forward.1} parent=1 // pred_region
      %1409 = dma.done [#allocation4], 128
    $region121: #{icm_forward.1} parent=1 // pred_fallthru
      _
    // Predicated region
    $region122: #{icm_forward.1} parent=1 // pred_check
      _
    $region123: #{icm_forward.1} parent=1 // pred_check_branch
      %1411 = sbr.rel (0) target = $region125
    $region124: #{icm_forward.1} parent=1 // pred_region
      %1412 = dma.done [#allocation19], 128
    $region125: #{icm_forward.1} parent=1 // pred_fallthru
      _
    %1413 = vsyncpa [#allocation3], 1
    %1414 = vsyncpa [#allocation6], 1
    %1415 = vsyncpa [#allocation9], 1
    %1416 = vsyncpa [#allocation12], 1
    %1417 = vsyncpa [#allocation15], 1
    %1418 = vsyncpa [#allocation4], 1
    %1419 = vsyncpa [#allocation19], 1

</llo_original>
